<compile_context>
chip_gen: v6e
topology: v6e:2x2x1
jax: 0.10.0
libtpu: 0.0.40
codegen_flags: <defaults>
</compile_context>

<pallas_src>
import functools

import jax
import jax.numpy as jnp
from jax.experimental import pallas as pl
from jax.experimental.pallas import tpu as pltpu


def _cbam_channel_attn_kernel(x_ref, w1t_ref, w2t_ref, o_ref,
                              sum_ref, max_ref, *, total_hw, needs_mask):
    # x_ref:   (b_blk, C, hw_tile)   input tile (any float dtype)
    # w1t_ref: (C, hidden)           fc1 weight, transposed
    # w2t_ref: (hidden, C_pad)       fc2 weight, transposed + lane-padded
    # o_ref:   (1, b_blk, C_pad)     sigmoid output (lane-dense)
    # sum_ref / max_ref: (b_blk, C)  f32 running accumulators
    k = pl.program_id(1)
    nk = pl.num_programs(1)

    @pl.when(k == 0)
    def _init():
        sum_ref[...] = jnp.zeros(sum_ref.shape, sum_ref.dtype)
        max_ref[...] = jnp.full(max_ref.shape, -jnp.inf, max_ref.dtype)

    x = x_ref[...].astype(jnp.float32)            # (b_blk, C, hw_tile)

    if needs_mask:
        # Only the very last spatial tile can contain out-of-range lanes, so
        # interior tiles take the cheap (mask-free) path.
        @pl.when(k < nk - 1)
        def _interior():
            sum_ref[...] = sum_ref[...] + jnp.sum(x, axis=-1)
            max_ref[...] = jnp.maximum(max_ref[...], jnp.max(x, axis=-1))

        @pl.when(k == nk - 1)
        def _tail():
            hw_tile = x.shape[-1]
            pos = jax.lax.broadcasted_iota(jnp.int32, x.shape, 2) + k * hw_tile
            valid = pos < total_hw
            sum_ref[...] = sum_ref[...] + jnp.sum(
                jnp.where(valid, x, 0.0), axis=-1)
            max_ref[...] = jnp.maximum(
                max_ref[...], jnp.max(jnp.where(valid, x, -jnp.inf), axis=-1))
    else:
        sum_ref[...] = sum_ref[...] + jnp.sum(x, axis=-1)          # (b_blk, C)
        max_ref[...] = jnp.maximum(max_ref[...], jnp.max(x, axis=-1))

    @pl.when(k == nk - 1)
    def _epilogue():
        avg = sum_ref[...] * (1.0 / total_hw)                       # (b_blk, C)
        mx = max_ref[...]                                           # (b_blk, C)
        b_blk = avg.shape[0]

        # Batch the shared bottleneck MLP over both pools: one pair of dots.
        pooled = jnp.concatenate([avg, mx], axis=0)                 # (2b, C)
        h = jnp.dot(pooled, w1t_ref[...],
                    preferred_element_type=jnp.float32)             # (2b, hidden)
        h = jnp.maximum(h, 0.0)                                     # ReLU
        out = jnp.dot(h, w2t_ref[...],
                      preferred_element_type=jnp.float32)           # (2b, C_pad)
        out = out[:b_blk] + out[b_blk:]                             # (b, C_pad)

        o_ref[...] = jax.nn.sigmoid(out).reshape(o_ref.shape).astype(o_ref.dtype)


def cbam_channel_attention(x, w1, w2, *, hw_tile=None, b_blk=1,
                           vmem_input_budget_bytes=8 << 20):
    """x: (B, C, H, W) NCHW.  w1: (C//r, C) fc1 weight.  w2: (C, C//r) fc2 weight.
    Returns (B, C, 1, 1) attention map, matching the PyTorch forward."""
    B, C, H, W = x.shape
    hidden = w1.shape[0]
    HW = H * W
    dtype_bytes = jnp.dtype(x.dtype).itemsize

    assert B % b_blk == 0, (B, b_blk)
    num_b_blocks = B // b_blk

    # --- choose the spatial (lane) tile ----------------------------------
    # Multiple of 128 (or full HW), double-buffered input bounded by budget.
    if hw_tile is None:
        max_tile = vmem_input_budget_bytes // (2 * b_blk * C * dtype_bytes)
        max_tile = max(128, (max_tile // 128) * 128)
        hw_tile = min(2048, max_tile)
    if hw_tile >= HW:
        hw_tile = HW                       # single block covers full spatial
    else:
        hw_tile = max(128, (hw_tile // 128) * 128)
    num_hw_blocks = pl.cdiv(HW, hw_tile)
    needs_mask = (HW % hw_tile) != 0

    # --- lane-dense output: pad C to a multiple of 128 --------------------
    C_pad = ((C + 127) // 128) * 128

    w1t = jnp.transpose(w1)                                    # (C, hidden)
    w2t = jnp.transpose(w2)                                    # (hidden, C)
    w2t_pad = jnp.pad(w2t, ((0, 0), (0, C_pad - C)))           # (hidden, C_pad)

    x_flat = x.reshape(B, C, HW)

    # --- explicit VMEM limit (headroom for v7x's 64 MiB physical VMEM) ----
    x_block_bytes = b_blk * C * hw_tile * dtype_bytes
    misc_bytes = ((C * hidden + hidden * C_pad) * 4        # weights
                  + 2 * b_blk * C_pad * dtype_bytes        # output (dbl buf)
                  + 2 * b_blk * C * 4)                     # accumulators
    vmem_limit = int(2 * x_block_bytes + misc_bytes + (8 << 20))
    vmem_limit = min(max(vmem_limit, 16 << 20), 48 << 20)

    kernel = functools.partial(
        _cbam_channel_attn_kernel, total_hw=HW, needs_mask=needs_mask)

    out = pl.pallas_call(
        kernel,
        out_shape=jax.ShapeDtypeStruct((num_b_blocks, b_blk, C_pad), x.dtype),
        grid=(num_b_blocks, num_hw_blocks),
        in_specs=[
            pl.BlockSpec((b_blk, C, hw_tile), lambda b, k: (b, 0, k)),
            # weights: constant block index -> stay VMEM-resident across steps
            pl.BlockSpec((C, hidden), lambda b, k: (0, 0)),
            pl.BlockSpec((hidden, C_pad), lambda b, k: (0, 0)),
        ],
        out_specs=pl.BlockSpec((1, b_blk, C_pad), lambda b, k: (b, 0, 0)),
        scratch_shapes=[
            pltpu.VMEM((b_blk, C), jnp.float32),   # running sum
            pltpu.VMEM((b_blk, C), jnp.float32),   # running max
        ],
        compiler_params=pltpu.CompilerParams(
            dimension_semantics=("parallel", "arbitrary"),
            vmem_limit_bytes=vmem_limit,
        ),
    )(x_flat, w1t, w2t_pad)

    return out.reshape(B, C_pad)[:, :C].reshape(B, C, 1, 1)


def _reference(x, w1, w2):
    # Pure-JAX reference mirroring the PyTorch module.
    avg = jnp.mean(x, axis=(2, 3))           # (B, C)
    mx = jnp.max(x, axis=(2, 3))             # (B, C)

    def mlp(v):
        h = jnp.maximum(v @ w1.T, 0.0)       # (B, hidden)
        return h @ w2.T                      # (B, C)

    out = mlp(avg) + mlp(mx)
    B, C = out.shape
    return jax.nn.sigmoid(out).reshape(B, C, 1, 1)


if __name__ == "__main__":
    B, C, ratio = 2, 64, 16
    hidden = C // ratio

    key = jax.random.PRNGKey(0)
    kx, k1, k2, kx2 = jax.random.split(key, 4)

    # Weights shaped like nn.Conv2d(C, C//r, 1) / nn.Conv2d(C//r, C, 1) with
    # the trailing 1x1 dims squeezed.
    w1 = jax.random.normal(k1, (hidden, C), dtype=jnp.float32) * 0.1
    w2 = jax.random.normal(k2, (C, hidden), dtype=jnp.float32) * 0.1

    # Case 1: HW divisible by the tile -> multi-step pipelined reduction.
    x = jax.random.normal(kx, (B, C, 16, 16), dtype=jnp.float32)
    out = jax.block_until_ready(cbam_channel_attention(x, w1, w2, hw_tile=128))
    ref = _reference(x, w1, w2)
    assert out.shape == (B, C, 1, 1), out.shape
    assert jnp.allclose(out, ref, atol=1e-5, rtol=1e-5), (
        float(jnp.max(jnp.abs(out - ref))))

    # Case 2: HW not divisible by the tile -> masked tail block.
    x2 = jax.random.normal(kx2, (B, C, 12, 12), dtype=jnp.float32)
    out2 = jax.block_until_ready(cbam_channel_attention(x2, w1, w2, hw_tile=128))
    ref2 = _reference(x2, w1, w2)
    assert jnp.allclose(out2, ref2, atol=1e-5, rtol=1e-5), (
        float(jnp.max(jnp.abs(out2 - ref2))))

    # Case 3: default tile selection (single full-HW block at this small size).
    out3 = jax.block_until_ready(cbam_channel_attention(x, w1, w2))
    assert jnp.allclose(out3, ref, atol=1e-5, rtol=1e-5), (
        float(jnp.max(jnp.abs(out3 - ref))))

    print("KERNEL_OK")
</pallas_src>

<mosaic_0001>
module attributes {stable_mosaic.version = 11 : i64} {
  func.func @_cbam_channel_attn_kernel(%arg0: i32, %arg1: i32, %arg2: memref<1x64x128xf32, #tpu.memory_space<vmem>>, %arg3: memref<64x4xf32, #tpu.memory_space<vmem>>, %arg4: memref<4x128xf32, #tpu.memory_space<vmem>>, %arg5: memref<1x1x128xf32, #tpu.memory_space<vmem>>, %arg6: memref<1x64xf32, #tpu.memory_space<vmem>>, %arg7: memref<1x64xf32, #tpu.memory_space<vmem>>) attributes {dimension_semantics = [#tpu.dimension_semantics<parallel>, #tpu.dimension_semantics<arbitrary>], iteration_bounds = array<i64: 2, 2>, scalar_prefetch = 0 : i64, scratch_operands = 2 : i64, tpu.core_type = #tpu.core_type<tc>, window_params = [{transform_indices = @transform_0, window_bounds = array<i64: 1, 64, 128>}, {pipeline_mode = #tpu.pipeline_mode<synchronous>, transform_indices = @transform_1, window_bounds = array<i64: 64, 4>}, {pipeline_mode = #tpu.pipeline_mode<synchronous>, transform_indices = @transform_2, window_bounds = array<i64: 4, 128>}, {transform_indices = @transform_3, window_bounds = array<i64: 1, 1, 128>}]} {
    %c0_i32 = arith.constant 0 : i32
    %0 = arith.cmpi eq, %arg1, %c0_i32 : i32
    %1 = arith.extui %0 : i1 to i32
    %c0_i32_0 = arith.constant 0 : i32
    %2 = arith.cmpi ne, %1, %c0_i32_0 : i32
    scf.if %2 {
      %cst_13 = arith.constant 0.000000e+00 : f32
      %15 = vector.broadcast %cst_13 : f32 to vector<1x64xf32>
      %c0_14 = arith.constant 0 : index
      %c0_15 = arith.constant 0 : index
      %16 = vector.load %arg6[%c0_14, %c0_15] : memref<1x64xf32, #tpu.memory_space<vmem>>, vector<1x64xf32>
      tpu.vector_store %arg6[%c0_14, %c0_15], %15 {strides = array<i32>} : memref<1x64xf32, #tpu.memory_space<vmem>>, vector<1x64xf32>,
      %cst_16 = arith.constant 0xFF800000 : f32
      %17 = vector.broadcast %cst_16 : f32 to vector<1x64xf32>
      %c0_17 = arith.constant 0 : index
      %c0_18 = arith.constant 0 : index
      %18 = vector.load %arg7[%c0_17, %c0_18] : memref<1x64xf32, #tpu.memory_space<vmem>>, vector<1x64xf32>
      tpu.vector_store %arg7[%c0_17, %c0_18], %17 {strides = array<i32>} : memref<1x64xf32, #tpu.memory_space<vmem>>, vector<1x64xf32>,
    } else {
    }
    %c0 = arith.constant 0 : index
    %c0_1 = arith.constant 0 : index
    %c0_2 = arith.constant 0 : index
    %3 = vector.load %arg2[%c0, %c0_1, %c0_2] : memref<1x64x128xf32, #tpu.memory_space<vmem>>, vector<1x64x128xf32>
    %c0_3 = arith.constant 0 : index
    %c0_4 = arith.constant 0 : index
    %4 = vector.load %arg6[%c0_3, %c0_4] : memref<1x64xf32, #tpu.memory_space<vmem>>, vector<1x64xf32>
    %cst = arith.constant dense<0.000000e+00> : vector<1x64xf32>
    %5 = vector.multi_reduction <add>, %3, %cst [2] : vector<1x64x128xf32> to vector<1x64xf32>
    %6 = arith.addf %4, %5 : vector<1x64xf32>
    %c0_5 = arith.constant 0 : index
    %c0_6 = arith.constant 0 : index
    %7 = vector.load %arg6[%c0_5, %c0_6] : memref<1x64xf32, #tpu.memory_space<vmem>>, vector<1x64xf32>
    tpu.vector_store %arg6[%c0_5, %c0_6], %6 {strides = array<i32>} : memref<1x64xf32, #tpu.memory_space<vmem>>, vector<1x64xf32>,
    %c0_7 = arith.constant 0 : index
    %c0_8 = arith.constant 0 : index
    %8 = vector.load %arg7[%c0_7, %c0_8] : memref<1x64xf32, #tpu.memory_space<vmem>>, vector<1x64xf32>
    %cst_9 = arith.constant dense<0xFF800000> : vector<1x64xf32>
    %9 = vector.multi_reduction <maximumf>, %3, %cst_9 [2] : vector<1x64x128xf32> to vector<1x64xf32>
    %10 = arith.maximumf %8, %9 : vector<1x64xf32>
    %c0_10 = arith.constant 0 : index
    %c0_11 = arith.constant 0 : index
    %11 = vector.load %arg7[%c0_10, %c0_11] : memref<1x64xf32, #tpu.memory_space<vmem>>, vector<1x64xf32>
    tpu.vector_store %arg7[%c0_10, %c0_11], %10 {strides = array<i32>} : memref<1x64xf32, #tpu.memory_space<vmem>>, vector<1x64xf32>,
    %c1_i32 = arith.constant 1 : i32
    %12 = arith.cmpi eq, %arg1, %c1_i32 : i32
    %13 = arith.extui %12 : i1 to i32
    %c0_i32_12 = arith.constant 0 : i32
    %14 = arith.cmpi ne, %13, %c0_i32_12 : i32
    scf.if %14 {
      %c0_13 = arith.constant 0 : index
      %c0_14 = arith.constant 0 : index
      %15 = vector.load %arg6[%c0_13, %c0_14] : memref<1x64xf32, #tpu.memory_space<vmem>>, vector<1x64xf32>
      %cst_15 = arith.constant 3.906250e-03 : f32
      %16 = vector.broadcast %cst_15 : f32 to vector<1x64xf32>
      %17 = arith.mulf %15, %16 : vector<1x64xf32>
      %c0_16 = arith.constant 0 : index
      %c0_17 = arith.constant 0 : index
      %18 = vector.load %arg7[%c0_16, %c0_17] : memref<1x64xf32, #tpu.memory_space<vmem>>, vector<1x64xf32>
      %19 = tpu.concatenate %17, %18 in 0 : vector<1x64xf32>, vector<1x64xf32> -> vector<2x64xf32>
      %c0_18 = arith.constant 0 : index
      %c0_19 = arith.constant 0 : index
      %20 = vector.load %arg3[%c0_18, %c0_19] : memref<64x4xf32, #tpu.memory_space<vmem>>, vector<64x4xf32>
      %cst_20 = arith.constant dense<0.000000e+00> : vector<2x4xf32>
      %21 = tpu.matmul %19, %20, %cst_20 {dimension_numbers = #tpu.dot_dimension_numbers<[1], [0], [0], [1], [0, 0, 1, 1], [], []>} : vector<2x64xf32>, vector<64x4xf32>, vector<2x4xf32> -> vector<2x4xf32>
      %cst_21 = arith.constant 0.000000e+00 : f32
      %22 = vector.broadcast %cst_21 : f32 to vector<2x4xf32>
      %23 = arith.maximumf %21, %22 : vector<2x4xf32>
      %c0_22 = arith.constant 0 : index
      %c0_23 = arith.constant 0 : index
      %24 = vector.load %arg4[%c0_22, %c0_23] : memref<4x128xf32, #tpu.memory_space<vmem>>, vector<4x128xf32>
      %cst_24 = arith.constant dense<0.000000e+00> : vector<2x128xf32>
      %25 = tpu.matmul %23, %24, %cst_24 {dimension_numbers = #tpu.dot_dimension_numbers<[1], [0], [0], [1], [0, 0, 1, 1], [], []>} : vector<2x4xf32>, vector<4x128xf32>, vector<2x128xf32> -> vector<2x128xf32>
      %26 = vector.extract_strided_slice %25 {offsets = [0, 0], sizes = [1, 128], strides = [1, 1]} : vector<2x128xf32> to vector<1x128xf32>
      %27 = vector.extract_strided_slice %25 {offsets = [1, 0], sizes = [1, 128], strides = [1, 1]} : vector<2x128xf32> to vector<1x128xf32>
      %28 = arith.addf %26, %27 : vector<1x128xf32>
      %29 = arith.negf %28 : vector<1x128xf32>
      %30 = math.exp %29 : vector<1x128xf32>
      %cst_25 = arith.constant 1.000000e+00 : f32
      %31 = vector.broadcast %cst_25 : f32 to vector<1x128xf32>
      %32 = arith.addf %31, %30 : vector<1x128xf32>
      %33 = arith.divf %31, %32 : vector<1x128xf32>
      %34 = vector.shape_cast %33 : vector<1x128xf32> to vector<1x1x128xf32>
      %c0_26 = arith.constant 0 : index
      %c0_27 = arith.constant 0 : index
      %c0_28 = arith.constant 0 : index
      %35 = vector.load %arg5[%c0_26, %c0_27, %c0_28] : memref<1x1x128xf32, #tpu.memory_space<vmem>>, vector<1x1x128xf32>
      tpu.vector_store %arg5[%c0_26, %c0_27, %c0_28], %34 {strides = array<i32>} : memref<1x1x128xf32, #tpu.memory_space<vmem>>, vector<1x1x128xf32>,
    } else {
    }
    return
  }
  func.func @transform_0(%arg0: i32, %arg1: i32) -> (i32, i32, i32) {
    %c0_i32 = arith.constant 0 : i32
    %c0_i32_0 = arith.constant 0 : i32
    return %arg0, %c0_i32, %arg1 : i32, i32, i32
  }
  func.func @transform_1(%arg0: i32, %arg1: i32) -> (i32, i32) {
    %c0_i32 = arith.constant 0 : i32
    %c0_i32_0 = arith.constant 0 : i32
    %c0_i32_1 = arith.constant 0 : i32
    return %c0_i32, %c0_i32_0 : i32, i32
  }
  func.func @transform_2(%arg0: i32, %arg1: i32) -> (i32, i32) {
    %c0_i32 = arith.constant 0 : i32
    %c0_i32_0 = arith.constant 0 : i32
    %c0_i32_1 = arith.constant 0 : i32
    return %c0_i32, %c0_i32_0 : i32, i32
  }
  func.func @transform_3(%arg0: i32, %arg1: i32) -> (i32, i32, i32) {
    %c0_i32 = arith.constant 0 : i32
    %c0_i32_0 = arith.constant 0 : i32
    %c0_i32_1 = arith.constant 0 : i32
    return %arg0, %c0_i32, %c0_i32_0 : i32, i32, i32
  }
}

</mosaic_0001>

<llo_original>
// kernel: tpu_custom_call.1
$region0: #{tpu_custom_call.1}
  #allocation0 [shape = 'u32[]', space=smem, size = 0x4, offset = 0x4, fixed_abs, tag = 'smem constant byte address 0x4 - core index']
  #allocation1 [shape = 'u32[144,128]{1,0:T(1,128)}', space=vmem, size = 0x12000, scoped, tag = 'internal scratch']
  #allocation2 [shape = 'f32[1,64]{1,0:T(1,128)}', space=vmem, size = 0x200, scoped, tag = 'scratch operand']
  #allocation3 [shape = 'f32[1,64]{1,0:T(1,128)}', space=vmem, size = 0x200, scoped, tag = 'scratch operand']
  %s0 = inlined_call_operand.hbm [shape: f32[2,64,256], index: 0, kind: input, shape index: {}]
  %s1 = inlined_call_operand.vmem [shape: f32[64,4], index: 1, kind: input, shape index: {}]
  %s2 = inlined_call_operand.vmem [shape: f32[4,128], index: 2, kind: input, shape index: {}]
  %s3 = inlined_call_operand.hbm [shape: f32[2,1,128], index: 3, kind: output, shape index: {}]
  %s4 = sld [smem:[#allocation0]]
  $region57: #{tpu_custom_call.1} parent=0
    _
  %s6 = ssub.s32 1, %s4
  %s7 = scalar_select 0, %s6, %s4
  $region1: #{tpu_custom_call.1} parent=0
    #allocation4 [shape = 'u8[65536]{0}', space=vmem, size = 0x10000, scoped, tag = 'input window, operand 0']
    #allocation5 [shape = 's32[2]{0}', space=sflag, size = 0x8, scoped, tag = 'scoped memory for tpu_custom_call.1']
    #allocation6 [shape = 's32[2]{0}', space=sflag, size = 0x8, scoped, tag = 'scoped memory for tpu_custom_call.1']
    #allocation7 [shape = 'u8[1024]{0}', space=vmem, size = 0x400, scoped, tag = 'output window, operand 0']
    %8 = vsyncpa [#allocation5], 0
    %s9 = scalar_lea.sflag [#allocation5], 1
    %10 = vsyncpa %s9, 0
    %11 = vsyncpa [#allocation6], 0
    %s12 = scalar_lea.sflag [#allocation6], 1
    %13 = vsyncpa %s12, 0
    loop: start=0, step=1, limit=6
    $region2: #{tpu_custom_call.1} parent=1 // loop_pre_header
      _
    $region3: #{tpu_custom_call.1} parent=1 // loop_header
      %s15 = sphi 0, %s19
      %p16 = scmp.ge.s32.totalorder %s15, 6
      %s22 = sphi 0, %s34
      %s23 = sphi 0, %s30
      %s24 = sphi 0, %s22
      %s25 = sphi 0, %s23
      %s26 = sphi 0, %s24
      %s27 = sphi 0, %s25
      %s39 = sphi 0, %s41
      %s42 = sphi 0, %s39
      %s43 = sphi 0, %s42
      %s59 = sphi 0, %s43
      %s63 = sphi 0, %s63
      %s65 = sphi 0, %s63
      %s66 = sphi 0, %s65
      %s80 = sphi 0, %s66
      %s84 = sphi 0, %s84
      %s86 = sphi 0, %s84
      %s87 = sphi 0, %s86
      %s101 = sphi 0, %s87
      %s107 = sphi 0, %s109
      %s110 = sphi 0, %s107
      %s111 = sphi 0, %s110
      %s127 = sphi 0, %s111
    $region4: #{tpu_custom_call.1} parent=1 // loop_header_branch
      %18 = sbr.rel (%p16) target = $region8
    $region5: #{tpu_custom_call.1} parent=1 // loop_body
      %s20 = ssub.s32 %s15, 1
      %s21 = ssub.s32 %s15, 2
      %s28 = sadd.s32 1, %s23
      %p29 = scmp.ge.s32.totalorder %s28, 2
      %s30 = scalar_select %p29, 0, %s28
      %s31 = sadd.s32 1, %s22
      %s32 = scalar_select %p29, %s31, %s22
      %p33 = scmp.ge.s32.totalorder %s32, 2
      %s34 = scalar_select %p33, 0, %s32
      %s35 = ssub.s32 %s22, %s34
      %s36 = ssub.s32 %s23, %s30
      %s37 = sor.u32 %s35, %s36
      %p38 = scmp.eq.s32.totalorder %s37, 0
      %s40 = sadd.s32 %s39, 1
      %s41 = scalar_select %p38, %s39, %s40
      %p44 = pneg %p38
      %p45 = scmp.eq.s32.totalorder %s15, 3
      %p46 = por %p44, %p45
      %p47 = scmp.ne.s32.totalorder %s39, %s42
      %p48 = scmp.eq.s32.totalorder %s15, 0
      %p49 = por %p47, %p48
      %p50 = scmp.ne.s32.totalorder %s39, %s42
      %p51 = scmp.eq.s32.totalorder %s20, 3
      %p52 = por %p50, %p51
      %p53 = scmp.ne.s32.totalorder %s42, %s43
      %p54 = scmp.eq.s32.totalorder %s20, 0
      %p55 = por %p53, %p54
      %p56 = scmp.ne.s32.totalorder %s42, %s43
      %p57 = scmp.eq.s32.totalorder %s21, 3
      %p58 = por %p56, %p57
      %p60 = scmp.ne.s32.totalorder %s43, %s59
      %p61 = scmp.eq.s32.totalorder %s21, 0
      %p62 = por %p60, %p61
      %s64 = sadd.s32 %s63, 1
      %p67 = scmp.eq.s32.totalorder %s15, 3
      %p68 = scmp.ne.s32.totalorder %s63, %s65
      %p69 = scmp.eq.s32.totalorder %s15, 0
      %p70 = por %p68, %p69
      %p71 = scmp.ne.s32.totalorder %s63, %s65
      %p72 = scmp.eq.s32.totalorder %s20, 3
      %p73 = por %p71, %p72
      %p74 = scmp.ne.s32.totalorder %s65, %s66
      %p75 = scmp.eq.s32.totalorder %s20, 0
      %p76 = por %p74, %p75
      %p77 = scmp.ne.s32.totalorder %s65, %s66
      %p78 = scmp.eq.s32.totalorder %s21, 3
      %p79 = por %p77, %p78
      %p81 = scmp.ne.s32.totalorder %s66, %s80
      %p82 = scmp.eq.s32.totalorder %s21, 0
      %p83 = por %p81, %p82
      %s85 = sadd.s32 %s84, 1
      %p88 = scmp.eq.s32.totalorder %s15, 3
      %p89 = scmp.ne.s32.totalorder %s84, %s86
      %p90 = scmp.eq.s32.totalorder %s15, 0
      %p91 = por %p89, %p90
      %p92 = scmp.ne.s32.totalorder %s84, %s86
      %p93 = scmp.eq.s32.totalorder %s20, 3
      %p94 = por %p92, %p93
      %p95 = scmp.ne.s32.totalorder %s86, %s87
      %p96 = scmp.eq.s32.totalorder %s20, 0
      %p97 = por %p95, %p96
      %p98 = scmp.ne.s32.totalorder %s86, %s87
      %p99 = scmp.eq.s32.totalorder %s21, 3
      %p100 = por %p98, %p99
      %p102 = scmp.ne.s32.totalorder %s87, %s101
      %p103 = scmp.eq.s32.totalorder %s21, 0
      %p104 = por %p102, %p103
      %s105 = ssub.s32 %s22, %s34
      %p106 = scmp.eq.s32.totalorder %s105, 0
      %s108 = sadd.s32 %s107, 1
      %s109 = scalar_select %p106, %s107, %s108
      %p112 = pneg %p106
      %p113 = scmp.eq.s32.totalorder %s15, 3
      %p114 = por %p112, %p113
      %p115 = scmp.ne.s32.totalorder %s107, %s110
      %p116 = scmp.eq.s32.totalorder %s15, 0
      %p117 = por %p115, %p116
      %p118 = scmp.ne.s32.totalorder %s107, %s110
      %p119 = scmp.eq.s32.totalorder %s20, 3
      %p120 = por %p118, %p119
      %p121 = scmp.ne.s32.totalorder %s110, %s111
      %p122 = scmp.eq.s32.totalorder %s20, 0
      %p123 = por %p121, %p122
      %p124 = scmp.ne.s32.totalorder %s110, %s111
      %p125 = scmp.eq.s32.totalorder %s21, 3
      %p126 = por %p124, %p125
      %p128 = scmp.ne.s32.totalorder %s111, %s127
      %p129 = scmp.eq.s32.totalorder %s21, 0
      %p130 = por %p128, %p129
      %p131 = scmp.le.s32.totalorder 1, %s15
      %p132 = scmp.lt.s32.totalorder %s15, 5
      %p133 = pnand %p131, %p132
      %p134 = pneg %p133
      // Predicated region
      $region9: #{tpu_custom_call.1} parent=5 // pred_check
        _
      $region10: #{tpu_custom_call.1} parent=5 // pred_check_branch
        %136 = sbr.rel (%p133) target = $region12
      $region11: #{tpu_custom_call.1} parent=5 // pred_region
        %s137 = ssub.s32 %s15, 1
        // Predicated region
        $region13: #{tpu_custom_call.1} parent=11 // pred_check
          %p138 = pneg %p76
        $region14: #{tpu_custom_call.1} parent=11 // pred_check_branch
          %140 = sbr.rel (%p138) target = $region16
        $region15: #{tpu_custom_call.1} parent=11 // pred_region
          _
        $region16: #{tpu_custom_call.1} parent=11 // pred_fallthru
          _
        // Predicated region
        $region17: #{tpu_custom_call.1} parent=11 // pred_check
          %p141 = pneg %p97
        $region18: #{tpu_custom_call.1} parent=11 // pred_check_branch
          %143 = sbr.rel (%p141) target = $region20
        $region19: #{tpu_custom_call.1} parent=11 // pred_region
          _
        $region20: #{tpu_custom_call.1} parent=11 // pred_fallthru
          _
      $region12: #{tpu_custom_call.1} parent=5 // pred_fallthru
        _
      %p144 = scmp.lt.s32.totalorder %s15, 4
      // Predicated region
      $region21: #{tpu_custom_call.1} parent=5 // pred_check
        %p145 = pneg %p144
      $region22: #{tpu_custom_call.1} parent=5 // pred_check_branch
        %147 = sbr.rel (%p145) target = $region24
      $region23: #{tpu_custom_call.1} parent=5 // pred_region
        // Predicated region
        $region25: #{tpu_custom_call.1} parent=23 // pred_check
          %p148 = pneg %p49
        $region26: #{tpu_custom_call.1} parent=23 // pred_check_branch
          %150 = sbr.rel (%p148) target = $region28
        $region27: #{tpu_custom_call.1} parent=23 // pred_region
          %s151 = sand.u32 %s39, 1
          %s152 = scalar_lea.sflag [#allocation5], %s151
          %s153 = sand.u32 %s39, 1
          %s154 = smul.addr %s153, 64
          %s155 = scalar_lea.vmem [#allocation4], %s154
          %s157 = ssub.s32 1024, 1024
          %158 = vsyncadd %s152, %s157
          %s159 = smul.addr %s22, 16
          %s160 = sadd.s32 %s23, %s159
          %s161 = smul.addr %s160, 128
          %s162 = scalar_lea.hbm %s0, %s161
          %s163 = sshll.u32 %s155, 4
          %s164 = int_to_ptr.vmem [resolvable:$true] %s163
          %169 = dma.hbm_to_vmem [thread:$0]  %s162, 1024, %s164, %s152, 256, 128, 8
        $region28: #{tpu_custom_call.1} parent=23 // pred_fallthru
          _
      $region24: #{tpu_custom_call.1} parent=5 // pred_fallthru
        _
      %p170 = scmp.le.s32.totalorder 1, %s15
      %p171 = scmp.lt.s32.totalorder %s15, 5
      %p172 = pnand %p170, %p171
      %p173 = pneg %p172
      // Predicated region
      $region29: #{tpu_custom_call.1} parent=5 // pred_check
        _
      $region30: #{tpu_custom_call.1} parent=5 // pred_check_branch
        %175 = sbr.rel (%p172) target = $region32
      $region31: #{tpu_custom_call.1} parent=5 // pred_region
        %s176 = ssub.s32 %s15, 1
        %s177 = sand.u32 %s42, 1
        %s178 = scalar_lea.sflag [#allocation5], %s177
        %s179 = sand.u32 %s42, 1
        %s180 = smul.addr %s179, 64
        %s181 = scalar_lea.vmem [#allocation4], %s180
        // Predicated region
        $region33: #{tpu_custom_call.1} parent=31 // pred_check
          %p182 = pneg %p55
        $region34: #{tpu_custom_call.1} parent=31 // pred_check_branch
          %184 = sbr.rel (%p182) target = $region36
        $region35: #{tpu_custom_call.1} parent=31 // pred_region
          %185 = dma.done %s178, 1024
        $region36: #{tpu_custom_call.1} parent=31 // pred_fallthru
          _
        %s186 = sand.u32 %s42, 1
        %s187 = scalar_lea.sflag [#allocation5], %s186
        %s188 = sand.u32 %s42, 1
        %s189 = smul.addr %s188, 64
        %s190 = scalar_lea.vmem [#allocation4], %s189
        %p191 = pneg %p55
        %p192 = pneg %p52
        %p193 = pneg %p76
        %p194 = pneg %p73
        %p195 = pneg %p97
        %p196 = pneg %p94
        %p197 = pneg %p123
        %p198 = pneg %p120
        %s199 = sand.u32 %s110, 1
        %s200 = scalar_lea.sflag [#allocation6], %s199
        %s201 = sand.u32 %s110, 1
        %s202 = scalar_lea.vmem [#allocation7], %s201
        %p203 = scmp.eq.s32.totalorder %s25, 0
        // Predicated region
        $region37: #{tpu_custom_call.1} parent=31 // pred_check
          %p204 = pneg %p203
        $region38: #{tpu_custom_call.1} parent=31 // pred_check_branch
          %206 = sbr.rel (%p204) target = $region40
        $region39: #{tpu_custom_call.1} parent=31 // pred_region
          %vm207 = vcmask 516096
          %208 = vst.msk [vmem:[#allocation2] sm:$0x1] %vm207, 0.0
          %209 = vst.msk [vmem:[#allocation3] sm:$0x1] %vm207, -inf
        $region40: #{tpu_custom_call.1} parent=31 // pred_fallthru
          _
        %v210 = vld [vmem:[%s181] sm:$0xff]
        %v211 = vld [vmem:[%s181 + $0x8] sm:$0xff]
        %v212 = vld [vmem:[%s181 + $0x10] sm:$0xff]
        %v213 = vld [vmem:[%s181 + $0x18] sm:$0xff]
        %v214 = vld [vmem:[%s181 + $0x20] sm:$0xff]
        %v215 = vld [vmem:[%s181 + $0x28] sm:$0xff]
        %v216 = vld [vmem:[%s181 + $0x30] sm:$0xff]
        %v217 = vld [vmem:[%s181 + $0x38] sm:$0xff]
        %v218 = vld [vmem:[#allocation2] sm:$0x1]
        %219 = vadd.xlane.f32.xlu0 %v210
        %v220 = vpop.xlane.xlu0 %219
        %221 = vadd.xlane.f32.xlu0 %v211
        %v222 = vpop.xlane.xlu0 %221
        %223 = vadd.xlane.f32.xlu0 %v212
        %v224 = vpop.xlane.xlu0 %223
        %225 = vadd.xlane.f32.xlu0 %v213
        %v226 = vpop.xlane.xlu0 %225
        %227 = vadd.xlane.f32.xlu0 %v214
        %v228 = vpop.xlane.xlu0 %227
        %229 = vadd.xlane.f32.xlu0 %v215
        %v230 = vpop.xlane.xlu0 %229
        %231 = vadd.xlane.f32.xlu0 %v216
        %v232 = vpop.xlane.xlu0 %231
        %233 = vadd.xlane.f32.xlu0 %v217
        %v234 = vpop.xlane.xlu0 %233
        %v243 = vlaneseq
        %v244 = vshrl.u32 %v243, 7
        %v245 = vsub.s32 0, %v244
        %v246 = vrot.slane %v220, %v245
        %v247 = vlaneseq
        %v248 = vshrl.u32 %v247, 7
        %v249 = vsub.s32 1, %v248
        %v250 = vrot.slane %v220, %v249
        %v251 = vlaneseq
        %v252 = vshrl.u32 %v251, 7
        %v253 = vsub.s32 2, %v252
        %v254 = vrot.slane %v220, %v253
        %v255 = vlaneseq
        %v256 = vshrl.u32 %v255, 7
        %v257 = vsub.s32 3, %v256
        %v258 = vrot.slane %v220, %v257
        %v259 = vlaneseq
        %v260 = vshrl.u32 %v259, 7
        %v261 = vsub.s32 4, %v260
        %v262 = vrot.slane %v220, %v261
        %v263 = vlaneseq
        %v264 = vshrl.u32 %v263, 7
        %v265 = vsub.s32 5, %v264
        %v266 = vrot.slane %v220, %v265
        %v267 = vlaneseq
        %v268 = vshrl.u32 %v267, 7
        %v269 = vsub.s32 6, %v268
        %v270 = vrot.slane %v220, %v269
        %v271 = vlaneseq
        %v272 = vshrl.u32 %v271, 7
        %v273 = vsub.s32 7, %v272
        %v274 = vrot.slane %v220, %v273
        %v275 = vlaneseq
        %v276 = vshrl.u32 %v275, 7
        %v277 = vsub.s32 0, %v276
        %v278 = vrot.slane %v222, %v277
        %v279 = vlaneseq
        %v280 = vshrl.u32 %v279, 7
        %v281 = vsub.s32 1, %v280
        %v282 = vrot.slane %v222, %v281
        %v283 = vlaneseq
        %v284 = vshrl.u32 %v283, 7
        %v285 = vsub.s32 2, %v284
        %v286 = vrot.slane %v222, %v285
        %v287 = vlaneseq
        %v288 = vshrl.u32 %v287, 7
        %v289 = vsub.s32 3, %v288
        %v290 = vrot.slane %v222, %v289
        %v291 = vlaneseq
        %v292 = vshrl.u32 %v291, 7
        %v293 = vsub.s32 4, %v292
        %v294 = vrot.slane %v222, %v293
        %v295 = vlaneseq
        %v296 = vshrl.u32 %v295, 7
        %v297 = vsub.s32 5, %v296
        %v298 = vrot.slane %v222, %v297
        %v299 = vlaneseq
        %v300 = vshrl.u32 %v299, 7
        %v301 = vsub.s32 6, %v300
        %v302 = vrot.slane %v222, %v301
        %v303 = vlaneseq
        %v304 = vshrl.u32 %v303, 7
        %v305 = vsub.s32 7, %v304
        %v306 = vrot.slane %v222, %v305
        %v307 = vlaneseq
        %v308 = vshrl.u32 %v307, 7
        %v309 = vsub.s32 0, %v308
        %v310 = vrot.slane %v224, %v309
        %v311 = vlaneseq
        %v312 = vshrl.u32 %v311, 7
        %v313 = vsub.s32 1, %v312
        %v314 = vrot.slane %v224, %v313
        %v315 = vlaneseq
        %v316 = vshrl.u32 %v315, 7
        %v317 = vsub.s32 2, %v316
        %v318 = vrot.slane %v224, %v317
        %v319 = vlaneseq
        %v320 = vshrl.u32 %v319, 7
        %v321 = vsub.s32 3, %v320
        %v322 = vrot.slane %v224, %v321
        %v323 = vlaneseq
        %v324 = vshrl.u32 %v323, 7
        %v325 = vsub.s32 4, %v324
        %v326 = vrot.slane %v224, %v325
        %v327 = vlaneseq
        %v328 = vshrl.u32 %v327, 7
        %v329 = vsub.s32 5, %v328
        %v330 = vrot.slane %v224, %v329
        %v331 = vlaneseq
        %v332 = vshrl.u32 %v331, 7
        %v333 = vsub.s32 6, %v332
        %v334 = vrot.slane %v224, %v333
        %v335 = vlaneseq
        %v336 = vshrl.u32 %v335, 7
        %v337 = vsub.s32 7, %v336
        %v338 = vrot.slane %v224, %v337
        %v339 = vlaneseq
        %v340 = vshrl.u32 %v339, 7
        %v341 = vsub.s32 0, %v340
        %v342 = vrot.slane %v226, %v341
        %v343 = vlaneseq
        %v344 = vshrl.u32 %v343, 7
        %v345 = vsub.s32 1, %v344
        %v346 = vrot.slane %v226, %v345
        %v347 = vlaneseq
        %v348 = vshrl.u32 %v347, 7
        %v349 = vsub.s32 2, %v348
        %v350 = vrot.slane %v226, %v349
        %v351 = vlaneseq
        %v352 = vshrl.u32 %v351, 7
        %v353 = vsub.s32 3, %v352
        %v354 = vrot.slane %v226, %v353
        %v355 = vlaneseq
        %v356 = vshrl.u32 %v355, 7
        %v357 = vsub.s32 4, %v356
        %v358 = vrot.slane %v226, %v357
        %v359 = vlaneseq
        %v360 = vshrl.u32 %v359, 7
        %v361 = vsub.s32 5, %v360
        %v362 = vrot.slane %v226, %v361
        %v363 = vlaneseq
        %v364 = vshrl.u32 %v363, 7
        %v365 = vsub.s32 6, %v364
        %v366 = vrot.slane %v226, %v365
        %v367 = vlaneseq
        %v368 = vshrl.u32 %v367, 7
        %v369 = vsub.s32 7, %v368
        %v370 = vrot.slane %v226, %v369
        %v371 = vlaneseq
        %v372 = vshrl.u32 %v371, 7
        %v373 = vsub.s32 0, %v372
        %v374 = vrot.slane %v228, %v373
        %v375 = vlaneseq
        %v376 = vshrl.u32 %v375, 7
        %v377 = vsub.s32 1, %v376
        %v378 = vrot.slane %v228, %v377
        %v379 = vlaneseq
        %v380 = vshrl.u32 %v379, 7
        %v381 = vsub.s32 2, %v380
        %v382 = vrot.slane %v228, %v381
        %v383 = vlaneseq
        %v384 = vshrl.u32 %v383, 7
        %v385 = vsub.s32 3, %v384
        %v386 = vrot.slane %v228, %v385
        %v387 = vlaneseq
        %v388 = vshrl.u32 %v387, 7
        %v389 = vsub.s32 4, %v388
        %v390 = vrot.slane %v228, %v389
        %v391 = vlaneseq
        %v392 = vshrl.u32 %v391, 7
        %v393 = vsub.s32 5, %v392
        %v394 = vrot.slane %v228, %v393
        %v395 = vlaneseq
        %v396 = vshrl.u32 %v395, 7
        %v397 = vsub.s32 6, %v396
        %v398 = vrot.slane %v228, %v397
        %v399 = vlaneseq
        %v400 = vshrl.u32 %v399, 7
        %v401 = vsub.s32 7, %v400
        %v402 = vrot.slane %v228, %v401
        %v403 = vlaneseq
        %v404 = vshrl.u32 %v403, 7
        %v405 = vsub.s32 0, %v404
        %v406 = vrot.slane %v230, %v405
        %v407 = vlaneseq
        %v408 = vshrl.u32 %v407, 7
        %v409 = vsub.s32 1, %v408
        %v410 = vrot.slane %v230, %v409
        %v411 = vlaneseq
        %v412 = vshrl.u32 %v411, 7
        %v413 = vsub.s32 2, %v412
        %v414 = vrot.slane %v230, %v413
        %v415 = vlaneseq
        %v416 = vshrl.u32 %v415, 7
        %v417 = vsub.s32 3, %v416
        %v418 = vrot.slane %v230, %v417
        %v419 = vlaneseq
        %v420 = vshrl.u32 %v419, 7
        %v421 = vsub.s32 4, %v420
        %v422 = vrot.slane %v230, %v421
        %v423 = vlaneseq
        %v424 = vshrl.u32 %v423, 7
        %v425 = vsub.s32 5, %v424
        %v426 = vrot.slane %v230, %v425
        %v427 = vlaneseq
        %v428 = vshrl.u32 %v427, 7
        %v429 = vsub.s32 6, %v428
        %v430 = vrot.slane %v230, %v429
        %v431 = vlaneseq
        %v432 = vshrl.u32 %v431, 7
        %v433 = vsub.s32 7, %v432
        %v434 = vrot.slane %v230, %v433
        %v435 = vlaneseq
        %v436 = vshrl.u32 %v435, 7
        %v437 = vsub.s32 0, %v436
        %v438 = vrot.slane %v232, %v437
        %v439 = vlaneseq
        %v440 = vshrl.u32 %v439, 7
        %v441 = vsub.s32 1, %v440
        %v442 = vrot.slane %v232, %v441
        %v443 = vlaneseq
        %v444 = vshrl.u32 %v443, 7
        %v445 = vsub.s32 2, %v444
        %v446 = vrot.slane %v232, %v445
        %v447 = vlaneseq
        %v448 = vshrl.u32 %v447, 7
        %v449 = vsub.s32 3, %v448
        %v450 = vrot.slane %v232, %v449
        %v451 = vlaneseq
        %v452 = vshrl.u32 %v451, 7
        %v453 = vsub.s32 4, %v452
        %v454 = vrot.slane %v232, %v453
        %v455 = vlaneseq
        %v456 = vshrl.u32 %v455, 7
        %v457 = vsub.s32 5, %v456
        %v458 = vrot.slane %v232, %v457
        %v459 = vlaneseq
        %v460 = vshrl.u32 %v459, 7
        %v461 = vsub.s32 6, %v460
        %v462 = vrot.slane %v232, %v461
        %v463 = vlaneseq
        %v464 = vshrl.u32 %v463, 7
        %v465 = vsub.s32 7, %v464
        %v466 = vrot.slane %v232, %v465
        %v467 = vlaneseq
        %v468 = vshrl.u32 %v467, 7
        %v469 = vsub.s32 0, %v468
        %v470 = vrot.slane %v234, %v469
        %v471 = vlaneseq
        %v472 = vshrl.u32 %v471, 7
        %v473 = vsub.s32 1, %v472
        %v474 = vrot.slane %v234, %v473
        %v475 = vlaneseq
        %v476 = vshrl.u32 %v475, 7
        %v477 = vsub.s32 2, %v476
        %v478 = vrot.slane %v234, %v477
        %v479 = vlaneseq
        %v480 = vshrl.u32 %v479, 7
        %v481 = vsub.s32 3, %v480
        %v482 = vrot.slane %v234, %v481
        %v483 = vlaneseq
        %v484 = vshrl.u32 %v483, 7
        %v485 = vsub.s32 4, %v484
        %v486 = vrot.slane %v234, %v485
        %v487 = vlaneseq
        %v488 = vshrl.u32 %v487, 7
        %v489 = vsub.s32 5, %v488
        %v490 = vrot.slane %v234, %v489
        %v491 = vlaneseq
        %v492 = vshrl.u32 %v491, 7
        %v493 = vsub.s32 6, %v492
        %v494 = vrot.slane %v234, %v493
        %v495 = vlaneseq
        %v496 = vshrl.u32 %v495, 7
        %v497 = vsub.s32 7, %v496
        %v498 = vrot.slane %v234, %v497
        %v499 = vcombine.low %v246, %v250
        %v500 = vcombine.low %v254, %v258
        %v501 = vcombine.low %v262, %v266
        %v502 = vcombine.low %v270, %v274
        %v504 = vunpack.c.l.s4 1966171168
        %v505 = vunpack.c.0.s8 %v504
        %v506 = vlaneseq
        %v507 = vshrl.u32 %v506, 7
        %v508 = vsub.s32 %v505, %v507
        %v509 = vrot.slane %v499, %v508
        %v511 = vunpack.c.l.s4 1966171168
        %v512 = vunpack.c.0.s8 %v511
        %v513 = vlaneseq
        %v514 = vshrl.u32 %v513, 7
        %v515 = vsub.s32 %v512, %v514
        %v516 = vrot.slane %v500, %v515
        %v518 = vunpack.c.l.s4 1966171168
        %v519 = vunpack.c.0.s8 %v518
        %v520 = vlaneseq
        %v521 = vshrl.u32 %v520, 7
        %v522 = vsub.s32 %v519, %v521
        %v523 = vrot.slane %v501, %v522
        %v525 = vunpack.c.l.s4 1966171168
        %v526 = vunpack.c.0.s8 %v525
        %v527 = vlaneseq
        %v528 = vshrl.u32 %v527, 7
        %v529 = vsub.s32 %v526, %v528
        %v530 = vrot.slane %v502, %v529
        %v531 = vcombine.low %v509, %v516
        %v532 = vcombine.low %v523, %v530
        %v534 = vunpack.c.l.s4 1966171168
        %v535 = vunpack.c.0.s8 %v534
        %v536 = vlaneseq
        %v537 = vshrl.u32 %v536, 7
        %v538 = vsub.s32 %v535, %v537
        %v539 = vrot.slane %v531, %v538
        %v541 = vunpack.c.l.s4 1966171168
        %v542 = vunpack.c.0.s8 %v541
        %v543 = vlaneseq
        %v544 = vshrl.u32 %v543, 7
        %v545 = vsub.s32 %v542, %v544
        %v546 = vrot.slane %v532, %v545
        %v547 = vcombine.low %v539, %v546
        %v548 = vcombine.low %v278, %v282
        %v549 = vcombine.low %v286, %v290
        %v550 = vcombine.low %v294, %v298
        %v551 = vcombine.low %v302, %v306
        %v553 = vunpack.c.l.s4 1966171168
        %v554 = vunpack.c.0.s8 %v553
        %v555 = vlaneseq
        %v556 = vshrl.u32 %v555, 7
        %v557 = vsub.s32 %v554, %v556
        %v558 = vrot.slane %v548, %v557
        %v560 = vunpack.c.l.s4 1966171168
        %v561 = vunpack.c.0.s8 %v560
        %v562 = vlaneseq
        %v563 = vshrl.u32 %v562, 7
        %v564 = vsub.s32 %v561, %v563
        %v565 = vrot.slane %v549, %v564
        %v567 = vunpack.c.l.s4 1966171168
        %v568 = vunpack.c.0.s8 %v567
        %v569 = vlaneseq
        %v570 = vshrl.u32 %v569, 7
        %v571 = vsub.s32 %v568, %v570
        %v572 = vrot.slane %v550, %v571
        %v574 = vunpack.c.l.s4 1966171168
        %v575 = vunpack.c.0.s8 %v574
        %v576 = vlaneseq
        %v577 = vshrl.u32 %v576, 7
        %v578 = vsub.s32 %v575, %v577
        %v579 = vrot.slane %v551, %v578
        %v580 = vcombine.low %v558, %v565
        %v581 = vcombine.low %v572, %v579
        %v583 = vunpack.c.l.s4 1966171168
        %v584 = vunpack.c.0.s8 %v583
        %v585 = vlaneseq
        %v586 = vshrl.u32 %v585, 7
        %v587 = vsub.s32 %v584, %v586
        %v588 = vrot.slane %v580, %v587
        %v590 = vunpack.c.l.s4 1966171168
        %v591 = vunpack.c.0.s8 %v590
        %v592 = vlaneseq
        %v593 = vshrl.u32 %v592, 7
        %v594 = vsub.s32 %v591, %v593
        %v595 = vrot.slane %v581, %v594
        %v596 = vcombine.low %v588, %v595
        %v597 = vcombine.low %v310, %v314
        %v598 = vcombine.low %v318, %v322
        %v599 = vcombine.low %v326, %v330
        %v600 = vcombine.low %v334, %v338
        %v602 = vunpack.c.l.s4 1966171168
        %v603 = vunpack.c.0.s8 %v602
        %v604 = vlaneseq
        %v605 = vshrl.u32 %v604, 7
        %v606 = vsub.s32 %v603, %v605
        %v607 = vrot.slane %v597, %v606
        %v609 = vunpack.c.l.s4 1966171168
        %v610 = vunpack.c.0.s8 %v609
        %v611 = vlaneseq
        %v612 = vshrl.u32 %v611, 7
        %v613 = vsub.s32 %v610, %v612
        %v614 = vrot.slane %v598, %v613
        %v616 = vunpack.c.l.s4 1966171168
        %v617 = vunpack.c.0.s8 %v616
        %v618 = vlaneseq
        %v619 = vshrl.u32 %v618, 7
        %v620 = vsub.s32 %v617, %v619
        %v621 = vrot.slane %v599, %v620
        %v623 = vunpack.c.l.s4 1966171168
        %v624 = vunpack.c.0.s8 %v623
        %v625 = vlaneseq
        %v626 = vshrl.u32 %v625, 7
        %v627 = vsub.s32 %v624, %v626
        %v628 = vrot.slane %v600, %v627
        %v629 = vcombine.low %v607, %v614
        %v630 = vcombine.low %v621, %v628
        %v632 = vunpack.c.l.s4 1966171168
        %v633 = vunpack.c.0.s8 %v632
        %v634 = vlaneseq
        %v635 = vshrl.u32 %v634, 7
        %v636 = vsub.s32 %v633, %v635
        %v637 = vrot.slane %v629, %v636
        %v639 = vunpack.c.l.s4 1966171168
        %v640 = vunpack.c.0.s8 %v639
        %v641 = vlaneseq
        %v642 = vshrl.u32 %v641, 7
        %v643 = vsub.s32 %v640, %v642
        %v644 = vrot.slane %v630, %v643
        %v645 = vcombine.low %v637, %v644
        %v646 = vcombine.low %v342, %v346
        %v647 = vcombine.low %v350, %v354
        %v648 = vcombine.low %v358, %v362
        %v649 = vcombine.low %v366, %v370
        %v651 = vunpack.c.l.s4 1966171168
        %v652 = vunpack.c.0.s8 %v651
        %v653 = vlaneseq
        %v654 = vshrl.u32 %v653, 7
        %v655 = vsub.s32 %v652, %v654
        %v656 = vrot.slane %v646, %v655
        %v658 = vunpack.c.l.s4 1966171168
        %v659 = vunpack.c.0.s8 %v658
        %v660 = vlaneseq
        %v661 = vshrl.u32 %v660, 7
        %v662 = vsub.s32 %v659, %v661
        %v663 = vrot.slane %v647, %v662
        %v665 = vunpack.c.l.s4 1966171168
        %v666 = vunpack.c.0.s8 %v665
        %v667 = vlaneseq
        %v668 = vshrl.u32 %v667, 7
        %v669 = vsub.s32 %v666, %v668
        %v670 = vrot.slane %v648, %v669
        %v672 = vunpack.c.l.s4 1966171168
        %v673 = vunpack.c.0.s8 %v672
        %v674 = vlaneseq
        %v675 = vshrl.u32 %v674, 7
        %v676 = vsub.s32 %v673, %v675
        %v677 = vrot.slane %v649, %v676
        %v678 = vcombine.low %v656, %v663
        %v679 = vcombine.low %v670, %v677
        %v681 = vunpack.c.l.s4 1966171168
        %v682 = vunpack.c.0.s8 %v681
        %v683 = vlaneseq
        %v684 = vshrl.u32 %v683, 7
        %v685 = vsub.s32 %v682, %v684
        %v686 = vrot.slane %v678, %v685
        %v688 = vunpack.c.l.s4 1966171168
        %v689 = vunpack.c.0.s8 %v688
        %v690 = vlaneseq
        %v691 = vshrl.u32 %v690, 7
        %v692 = vsub.s32 %v689, %v691
        %v693 = vrot.slane %v679, %v692
        %v694 = vcombine.low %v686, %v693
        %v695 = vcombine.low %v374, %v378
        %v696 = vcombine.low %v382, %v386
        %v697 = vcombine.low %v390, %v394
        %v698 = vcombine.low %v398, %v402
        %v700 = vunpack.c.l.s4 1966171168
        %v701 = vunpack.c.0.s8 %v700
        %v702 = vlaneseq
        %v703 = vshrl.u32 %v702, 7
        %v704 = vsub.s32 %v701, %v703
        %v705 = vrot.slane %v695, %v704
        %v707 = vunpack.c.l.s4 1966171168
        %v708 = vunpack.c.0.s8 %v707
        %v709 = vlaneseq
        %v710 = vshrl.u32 %v709, 7
        %v711 = vsub.s32 %v708, %v710
        %v712 = vrot.slane %v696, %v711
        %v714 = vunpack.c.l.s4 1966171168
        %v715 = vunpack.c.0.s8 %v714
        %v716 = vlaneseq
        %v717 = vshrl.u32 %v716, 7
        %v718 = vsub.s32 %v715, %v717
        %v719 = vrot.slane %v697, %v718
        %v721 = vunpack.c.l.s4 1966171168
        %v722 = vunpack.c.0.s8 %v721
        %v723 = vlaneseq
        %v724 = vshrl.u32 %v723, 7
        %v725 = vsub.s32 %v722, %v724
        %v726 = vrot.slane %v698, %v725
        %v727 = vcombine.low %v705, %v712
        %v728 = vcombine.low %v719, %v726
        %v730 = vunpack.c.l.s4 1966171168
        %v731 = vunpack.c.0.s8 %v730
        %v732 = vlaneseq
        %v733 = vshrl.u32 %v732, 7
        %v734 = vsub.s32 %v731, %v733
        %v735 = vrot.slane %v727, %v734
        %v737 = vunpack.c.l.s4 1966171168
        %v738 = vunpack.c.0.s8 %v737
        %v739 = vlaneseq
        %v740 = vshrl.u32 %v739, 7
        %v741 = vsub.s32 %v738, %v740
        %v742 = vrot.slane %v728, %v741
        %v743 = vcombine.low %v735, %v742
        %v744 = vcombine.low %v406, %v410
        %v745 = vcombine.low %v414, %v418
        %v746 = vcombine.low %v422, %v426
        %v747 = vcombine.low %v430, %v434
        %v749 = vunpack.c.l.s4 1966171168
        %v750 = vunpack.c.0.s8 %v749
        %v751 = vlaneseq
        %v752 = vshrl.u32 %v751, 7
        %v753 = vsub.s32 %v750, %v752
        %v754 = vrot.slane %v744, %v753
        %v756 = vunpack.c.l.s4 1966171168
        %v757 = vunpack.c.0.s8 %v756
        %v758 = vlaneseq
        %v759 = vshrl.u32 %v758, 7
        %v760 = vsub.s32 %v757, %v759
        %v761 = vrot.slane %v745, %v760
        %v763 = vunpack.c.l.s4 1966171168
        %v764 = vunpack.c.0.s8 %v763
        %v765 = vlaneseq
        %v766 = vshrl.u32 %v765, 7
        %v767 = vsub.s32 %v764, %v766
        %v768 = vrot.slane %v746, %v767
        %v770 = vunpack.c.l.s4 1966171168
        %v771 = vunpack.c.0.s8 %v770
        %v772 = vlaneseq
        %v773 = vshrl.u32 %v772, 7
        %v774 = vsub.s32 %v771, %v773
        %v775 = vrot.slane %v747, %v774
        %v776 = vcombine.low %v754, %v761
        %v777 = vcombine.low %v768, %v775
        %v779 = vunpack.c.l.s4 1966171168
        %v780 = vunpack.c.0.s8 %v779
        %v781 = vlaneseq
        %v782 = vshrl.u32 %v781, 7
        %v783 = vsub.s32 %v780, %v782
        %v784 = vrot.slane %v776, %v783
        %v786 = vunpack.c.l.s4 1966171168
        %v787 = vunpack.c.0.s8 %v786
        %v788 = vlaneseq
        %v789 = vshrl.u32 %v788, 7
        %v790 = vsub.s32 %v787, %v789
        %v791 = vrot.slane %v777, %v790
        %v792 = vcombine.low %v784, %v791
        %v793 = vcombine.low %v438, %v442
        %v794 = vcombine.low %v446, %v450
        %v795 = vcombine.low %v454, %v458
        %v796 = vcombine.low %v462, %v466
        %v798 = vunpack.c.l.s4 1966171168
        %v799 = vunpack.c.0.s8 %v798
        %v800 = vlaneseq
        %v801 = vshrl.u32 %v800, 7
        %v802 = vsub.s32 %v799, %v801
        %v803 = vrot.slane %v793, %v802
        %v805 = vunpack.c.l.s4 1966171168
        %v806 = vunpack.c.0.s8 %v805
        %v807 = vlaneseq
        %v808 = vshrl.u32 %v807, 7
        %v809 = vsub.s32 %v806, %v808
        %v810 = vrot.slane %v794, %v809
        %v812 = vunpack.c.l.s4 1966171168
        %v813 = vunpack.c.0.s8 %v812
        %v814 = vlaneseq
        %v815 = vshrl.u32 %v814, 7
        %v816 = vsub.s32 %v813, %v815
        %v817 = vrot.slane %v795, %v816
        %v819 = vunpack.c.l.s4 1966171168
        %v820 = vunpack.c.0.s8 %v819
        %v821 = vlaneseq
        %v822 = vshrl.u32 %v821, 7
        %v823 = vsub.s32 %v820, %v822
        %v824 = vrot.slane %v796, %v823
        %v825 = vcombine.low %v803, %v810
        %v826 = vcombine.low %v817, %v824
        %v828 = vunpack.c.l.s4 1966171168
        %v829 = vunpack.c.0.s8 %v828
        %v830 = vlaneseq
        %v831 = vshrl.u32 %v830, 7
        %v832 = vsub.s32 %v829, %v831
        %v833 = vrot.slane %v825, %v832
        %v835 = vunpack.c.l.s4 1966171168
        %v836 = vunpack.c.0.s8 %v835
        %v837 = vlaneseq
        %v838 = vshrl.u32 %v837, 7
        %v839 = vsub.s32 %v836, %v838
        %v840 = vrot.slane %v826, %v839
        %v841 = vcombine.low %v833, %v840
        %v842 = vcombine.low %v470, %v474
        %v843 = vcombine.low %v478, %v482
        %v844 = vcombine.low %v486, %v490
        %v845 = vcombine.low %v494, %v498
        %v847 = vunpack.c.l.s4 1966171168
        %v848 = vunpack.c.0.s8 %v847
        %v849 = vlaneseq
        %v850 = vshrl.u32 %v849, 7
        %v851 = vsub.s32 %v848, %v850
        %v852 = vrot.slane %v842, %v851
        %v854 = vunpack.c.l.s4 1966171168
        %v855 = vunpack.c.0.s8 %v854
        %v856 = vlaneseq
        %v857 = vshrl.u32 %v856, 7
        %v858 = vsub.s32 %v855, %v857
        %v859 = vrot.slane %v843, %v858
        %v861 = vunpack.c.l.s4 1966171168
        %v862 = vunpack.c.0.s8 %v861
        %v863 = vlaneseq
        %v864 = vshrl.u32 %v863, 7
        %v865 = vsub.s32 %v862, %v864
        %v866 = vrot.slane %v844, %v865
        %v868 = vunpack.c.l.s4 1966171168
        %v869 = vunpack.c.0.s8 %v868
        %v870 = vlaneseq
        %v871 = vshrl.u32 %v870, 7
        %v872 = vsub.s32 %v869, %v871
        %v873 = vrot.slane %v845, %v872
        %v874 = vcombine.low %v852, %v859
        %v875 = vcombine.low %v866, %v873
        %v877 = vunpack.c.l.s4 1966171168
        %v878 = vunpack.c.0.s8 %v877
        %v879 = vlaneseq
        %v880 = vshrl.u32 %v879, 7
        %v881 = vsub.s32 %v878, %v880
        %v882 = vrot.slane %v874, %v881
        %v884 = vunpack.c.l.s4 1966171168
        %v885 = vunpack.c.0.s8 %v884
        %v886 = vlaneseq
        %v887 = vshrl.u32 %v886, 7
        %v888 = vsub.s32 %v885, %v887
        %v889 = vrot.slane %v875, %v888
        %v890 = vcombine.low %v882, %v889
        %891 = vset.pattern.permute.xlu0 0
        %892 = vperm.xlu0 %891, %v547
        %v893 = vpop.permute.xlu0 %892
        %894 = vset.pattern.permute.xlu0 0
        %895 = vperm.xlu0 %894, %v596
        %v896 = vpop.permute.xlu0 %895
        %897 = vset.pattern.permute.xlu0 0
        %898 = vperm.xlu0 %897, %v645
        %v899 = vpop.permute.xlu0 %898
        %900 = vset.pattern.permute.xlu0 0
        %901 = vperm.xlu0 %900, %v694
        %v902 = vpop.permute.xlu0 %901
        %903 = vset.pattern.permute.xlu0 0
        %904 = vperm.xlu0 %903, %v743
        %v905 = vpop.permute.xlu0 %904
        %906 = vset.pattern.permute.xlu0 0
        %907 = vperm.xlu0 %906, %v792
        %v908 = vpop.permute.xlu0 %907
        %909 = vset.pattern.permute.xlu0 0
        %910 = vperm.xlu0 %909, %v841
        %v911 = vpop.permute.xlu0 %910
        %912 = vset.pattern.permute.xlu0 0
        %913 = vperm.xlu0 %912, %v890
        %v914 = vpop.permute.xlu0 %913
        %v915 = vlaneseq
        %v916 = vand.u32 %v915, 127
        %v917 = vlaneseq
        %v918 = vshrl.u32 %v917, 7
        %v919 = vsub.s32 %v916, %v918
        %v920 = vrot.slane %v893, %v919
        %v921 = vadd.s32 %v916, 4294967288
        %v922 = vlaneseq
        %v923 = vshrl.u32 %v922, 7
        %v924 = vsub.s32 %v921, %v923
        %v925 = vrot.slane %v896, %v924
        %vm926 = vcmask 130112
        %v927 = vsel %vm926, %v925, %v920
        %v928 = vadd.s32 %v916, 4294967280
        %v929 = vlaneseq
        %v930 = vshrl.u32 %v929, 7
        %v931 = vsub.s32 %v928, %v930
        %v932 = vrot.slane %v899, %v931
        %vm933 = vcmask 195712
        %v934 = vsel %vm933, %v932, %v927
        %v935 = vadd.s32 %v916, 4294967272
        %v936 = vlaneseq
        %v937 = vshrl.u32 %v936, 7
        %v938 = vsub.s32 %v935, %v937
        %v939 = vrot.slane %v902, %v938
        %vm940 = vcmask 261312
        %v941 = vsel %vm940, %v939, %v934
        %v942 = vadd.s32 %v916, 4294967264
        %v943 = vlaneseq
        %v944 = vshrl.u32 %v943, 7
        %v945 = vsub.s32 %v942, %v944
        %v946 = vrot.slane %v905, %v945
        %vm947 = vcmask 326912
        %v948 = vsel %vm947, %v946, %v941
        %v949 = vadd.s32 %v916, 4294967256
        %v950 = vlaneseq
        %v951 = vshrl.u32 %v950, 7
        %v952 = vsub.s32 %v949, %v951
        %v953 = vrot.slane %v908, %v952
        %vm954 = vcmask 392512
        %v955 = vsel %vm954, %v953, %v948
        %v956 = vadd.s32 %v916, 4294967248
        %v957 = vlaneseq
        %v958 = vshrl.u32 %v957, 7
        %v959 = vsub.s32 %v956, %v958
        %v960 = vrot.slane %v911, %v959
        %vm961 = vcmask 458112
        %v962 = vsel %vm961, %v960, %v955
        %v963 = vadd.s32 %v916, 4294967240
        %v964 = vlaneseq
        %v965 = vshrl.u32 %v964, 7
        %v966 = vsub.s32 %v963, %v965
        %v967 = vrot.slane %v914, %v966
        %vm968 = vcmask 523712
        %v969 = vsel %vm968, %v967, %v962
        %v971 = vunpack.c.l.s4 1966171168
        %v972 = vunpack.c.0.s8 %v971
        %v973 = vlaneseq
        %v974 = vshrl.u32 %v973, 7
        %v975 = vsub.s32 %v972, %v974
        %v976 = vrot.slane %v969, %v975
        %v978 = vunpack.c.l.s4 1966171168
        %v979 = vunpack.c.0.s8 %v978
        %v980 = vlaneseq
        %v981 = vshrl.u32 %v980, 7
        %v982 = vsub.s32 %v979, %v981
        %v983 = vrot.slane %v976, %v982
        %v985 = vadd.f32 %v218, %v983
        %vm986 = vcmask 516096
        %987 = vst.msk [vmem:[#allocation2] sm:$0x1] %vm986, %v985
        %v988 = vld [vmem:[#allocation3] sm:$0x1]
        %989 = vmax.xlane.f32.xlu0 %v210
        %v990 = vpop.xlane.xlu0 %989
        %991 = vmax.xlane.f32.xlu0 %v211
        %v992 = vpop.xlane.xlu0 %991
        %993 = vmax.xlane.f32.xlu0 %v212
        %v994 = vpop.xlane.xlu0 %993
        %995 = vmax.xlane.f32.xlu0 %v213
        %v996 = vpop.xlane.xlu0 %995
        %997 = vmax.xlane.f32.xlu0 %v214
        %v998 = vpop.xlane.xlu0 %997
        %999 = vmax.xlane.f32.xlu0 %v215
        %v1000 = vpop.xlane.xlu0 %999
        %1001 = vmax.xlane.f32.xlu0 %v216
        %v1002 = vpop.xlane.xlu0 %1001
        %1003 = vmax.xlane.f32.xlu0 %v217
        %v1004 = vpop.xlane.xlu0 %1003
        %v1013 = vlaneseq
        %v1014 = vshrl.u32 %v1013, 7
        %v1015 = vsub.s32 0, %v1014
        %v1016 = vrot.slane %v990, %v1015
        %v1017 = vlaneseq
        %v1018 = vshrl.u32 %v1017, 7
        %v1019 = vsub.s32 1, %v1018
        %v1020 = vrot.slane %v990, %v1019
        %v1021 = vlaneseq
        %v1022 = vshrl.u32 %v1021, 7
        %v1023 = vsub.s32 2, %v1022
        %v1024 = vrot.slane %v990, %v1023
        %v1025 = vlaneseq
        %v1026 = vshrl.u32 %v1025, 7
        %v1027 = vsub.s32 3, %v1026
        %v1028 = vrot.slane %v990, %v1027
        %v1029 = vlaneseq
        %v1030 = vshrl.u32 %v1029, 7
        %v1031 = vsub.s32 4, %v1030
        %v1032 = vrot.slane %v990, %v1031
        %v1033 = vlaneseq
        %v1034 = vshrl.u32 %v1033, 7
        %v1035 = vsub.s32 5, %v1034
        %v1036 = vrot.slane %v990, %v1035
        %v1037 = vlaneseq
        %v1038 = vshrl.u32 %v1037, 7
        %v1039 = vsub.s32 6, %v1038
        %v1040 = vrot.slane %v990, %v1039
        %v1041 = vlaneseq
        %v1042 = vshrl.u32 %v1041, 7
        %v1043 = vsub.s32 7, %v1042
        %v1044 = vrot.slane %v990, %v1043
        %v1045 = vlaneseq
        %v1046 = vshrl.u32 %v1045, 7
        %v1047 = vsub.s32 0, %v1046
        %v1048 = vrot.slane %v992, %v1047
        %v1049 = vlaneseq
        %v1050 = vshrl.u32 %v1049, 7
        %v1051 = vsub.s32 1, %v1050
        %v1052 = vrot.slane %v992, %v1051
        %v1053 = vlaneseq
        %v1054 = vshrl.u32 %v1053, 7
        %v1055 = vsub.s32 2, %v1054
        %v1056 = vrot.slane %v992, %v1055
        %v1057 = vlaneseq
        %v1058 = vshrl.u32 %v1057, 7
        %v1059 = vsub.s32 3, %v1058
        %v1060 = vrot.slane %v992, %v1059
        %v1061 = vlaneseq
        %v1062 = vshrl.u32 %v1061, 7
        %v1063 = vsub.s32 4, %v1062
        %v1064 = vrot.slane %v992, %v1063
        %v1065 = vlaneseq
        %v1066 = vshrl.u32 %v1065, 7
        %v1067 = vsub.s32 5, %v1066
        %v1068 = vrot.slane %v992, %v1067
        %v1069 = vlaneseq
        %v1070 = vshrl.u32 %v1069, 7
        %v1071 = vsub.s32 6, %v1070
        %v1072 = vrot.slane %v992, %v1071
        %v1073 = vlaneseq
        %v1074 = vshrl.u32 %v1073, 7
        %v1075 = vsub.s32 7, %v1074
        %v1076 = vrot.slane %v992, %v1075
        %v1077 = vlaneseq
        %v1078 = vshrl.u32 %v1077, 7
        %v1079 = vsub.s32 0, %v1078
        %v1080 = vrot.slane %v994, %v1079
        %v1081 = vlaneseq
        %v1082 = vshrl.u32 %v1081, 7
        %v1083 = vsub.s32 1, %v1082
        %v1084 = vrot.slane %v994, %v1083
        %v1085 = vlaneseq
        %v1086 = vshrl.u32 %v1085, 7
        %v1087 = vsub.s32 2, %v1086
        %v1088 = vrot.slane %v994, %v1087
        %v1089 = vlaneseq
        %v1090 = vshrl.u32 %v1089, 7
        %v1091 = vsub.s32 3, %v1090
        %v1092 = vrot.slane %v994, %v1091
        %v1093 = vlaneseq
        %v1094 = vshrl.u32 %v1093, 7
        %v1095 = vsub.s32 4, %v1094
        %v1096 = vrot.slane %v994, %v1095
        %v1097 = vlaneseq
        %v1098 = vshrl.u32 %v1097, 7
        %v1099 = vsub.s32 5, %v1098
        %v1100 = vrot.slane %v994, %v1099
        %v1101 = vlaneseq
        %v1102 = vshrl.u32 %v1101, 7
        %v1103 = vsub.s32 6, %v1102
        %v1104 = vrot.slane %v994, %v1103
        %v1105 = vlaneseq
        %v1106 = vshrl.u32 %v1105, 7
        %v1107 = vsub.s32 7, %v1106
        %v1108 = vrot.slane %v994, %v1107
        %v1109 = vlaneseq
        %v1110 = vshrl.u32 %v1109, 7
        %v1111 = vsub.s32 0, %v1110
        %v1112 = vrot.slane %v996, %v1111
        %v1113 = vlaneseq
        %v1114 = vshrl.u32 %v1113, 7
        %v1115 = vsub.s32 1, %v1114
        %v1116 = vrot.slane %v996, %v1115
        %v1117 = vlaneseq
        %v1118 = vshrl.u32 %v1117, 7
        %v1119 = vsub.s32 2, %v1118
        %v1120 = vrot.slane %v996, %v1119
        %v1121 = vlaneseq
        %v1122 = vshrl.u32 %v1121, 7
        %v1123 = vsub.s32 3, %v1122
        %v1124 = vrot.slane %v996, %v1123
        %v1125 = vlaneseq
        %v1126 = vshrl.u32 %v1125, 7
        %v1127 = vsub.s32 4, %v1126
        %v1128 = vrot.slane %v996, %v1127
        %v1129 = vlaneseq
        %v1130 = vshrl.u32 %v1129, 7
        %v1131 = vsub.s32 5, %v1130
        %v1132 = vrot.slane %v996, %v1131
        %v1133 = vlaneseq
        %v1134 = vshrl.u32 %v1133, 7
        %v1135 = vsub.s32 6, %v1134
        %v1136 = vrot.slane %v996, %v1135
        %v1137 = vlaneseq
        %v1138 = vshrl.u32 %v1137, 7
        %v1139 = vsub.s32 7, %v1138
        %v1140 = vrot.slane %v996, %v1139
        %v1141 = vlaneseq
        %v1142 = vshrl.u32 %v1141, 7
        %v1143 = vsub.s32 0, %v1142
        %v1144 = vrot.slane %v998, %v1143
        %v1145 = vlaneseq
        %v1146 = vshrl.u32 %v1145, 7
        %v1147 = vsub.s32 1, %v1146
        %v1148 = vrot.slane %v998, %v1147
        %v1149 = vlaneseq
        %v1150 = vshrl.u32 %v1149, 7
        %v1151 = vsub.s32 2, %v1150
        %v1152 = vrot.slane %v998, %v1151
        %v1153 = vlaneseq
        %v1154 = vshrl.u32 %v1153, 7
        %v1155 = vsub.s32 3, %v1154
        %v1156 = vrot.slane %v998, %v1155
        %v1157 = vlaneseq
        %v1158 = vshrl.u32 %v1157, 7
        %v1159 = vsub.s32 4, %v1158
        %v1160 = vrot.slane %v998, %v1159
        %v1161 = vlaneseq
        %v1162 = vshrl.u32 %v1161, 7
        %v1163 = vsub.s32 5, %v1162
        %v1164 = vrot.slane %v998, %v1163
        %v1165 = vlaneseq
        %v1166 = vshrl.u32 %v1165, 7
        %v1167 = vsub.s32 6, %v1166
        %v1168 = vrot.slane %v998, %v1167
        %v1169 = vlaneseq
        %v1170 = vshrl.u32 %v1169, 7
        %v1171 = vsub.s32 7, %v1170
        %v1172 = vrot.slane %v998, %v1171
        %v1173 = vlaneseq
        %v1174 = vshrl.u32 %v1173, 7
        %v1175 = vsub.s32 0, %v1174
        %v1176 = vrot.slane %v1000, %v1175
        %v1177 = vlaneseq
        %v1178 = vshrl.u32 %v1177, 7
        %v1179 = vsub.s32 1, %v1178
        %v1180 = vrot.slane %v1000, %v1179
        %v1181 = vlaneseq
        %v1182 = vshrl.u32 %v1181, 7
        %v1183 = vsub.s32 2, %v1182
        %v1184 = vrot.slane %v1000, %v1183
        %v1185 = vlaneseq
        %v1186 = vshrl.u32 %v1185, 7
        %v1187 = vsub.s32 3, %v1186
        %v1188 = vrot.slane %v1000, %v1187
        %v1189 = vlaneseq
        %v1190 = vshrl.u32 %v1189, 7
        %v1191 = vsub.s32 4, %v1190
        %v1192 = vrot.slane %v1000, %v1191
        %v1193 = vlaneseq
        %v1194 = vshrl.u32 %v1193, 7
        %v1195 = vsub.s32 5, %v1194
        %v1196 = vrot.slane %v1000, %v1195
        %v1197 = vlaneseq
        %v1198 = vshrl.u32 %v1197, 7
        %v1199 = vsub.s32 6, %v1198
        %v1200 = vrot.slane %v1000, %v1199
        %v1201 = vlaneseq
        %v1202 = vshrl.u32 %v1201, 7
        %v1203 = vsub.s32 7, %v1202
        %v1204 = vrot.slane %v1000, %v1203
        %v1205 = vlaneseq
        %v1206 = vshrl.u32 %v1205, 7
        %v1207 = vsub.s32 0, %v1206
        %v1208 = vrot.slane %v1002, %v1207
        %v1209 = vlaneseq
        %v1210 = vshrl.u32 %v1209, 7
        %v1211 = vsub.s32 1, %v1210
        %v1212 = vrot.slane %v1002, %v1211
        %v1213 = vlaneseq
        %v1214 = vshrl.u32 %v1213, 7
        %v1215 = vsub.s32 2, %v1214
        %v1216 = vrot.slane %v1002, %v1215
        %v1217 = vlaneseq
        %v1218 = vshrl.u32 %v1217, 7
        %v1219 = vsub.s32 3, %v1218
        %v1220 = vrot.slane %v1002, %v1219
        %v1221 = vlaneseq
        %v1222 = vshrl.u32 %v1221, 7
        %v1223 = vsub.s32 4, %v1222
        %v1224 = vrot.slane %v1002, %v1223
        %v1225 = vlaneseq
        %v1226 = vshrl.u32 %v1225, 7
        %v1227 = vsub.s32 5, %v1226
        %v1228 = vrot.slane %v1002, %v1227
        %v1229 = vlaneseq
        %v1230 = vshrl.u32 %v1229, 7
        %v1231 = vsub.s32 6, %v1230
        %v1232 = vrot.slane %v1002, %v1231
        %v1233 = vlaneseq
        %v1234 = vshrl.u32 %v1233, 7
        %v1235 = vsub.s32 7, %v1234
        %v1236 = vrot.slane %v1002, %v1235
        %v1237 = vlaneseq
        %v1238 = vshrl.u32 %v1237, 7
        %v1239 = vsub.s32 0, %v1238
        %v1240 = vrot.slane %v1004, %v1239
        %v1241 = vlaneseq
        %v1242 = vshrl.u32 %v1241, 7
        %v1243 = vsub.s32 1, %v1242
        %v1244 = vrot.slane %v1004, %v1243
        %v1245 = vlaneseq
        %v1246 = vshrl.u32 %v1245, 7
        %v1247 = vsub.s32 2, %v1246
        %v1248 = vrot.slane %v1004, %v1247
        %v1249 = vlaneseq
        %v1250 = vshrl.u32 %v1249, 7
        %v1251 = vsub.s32 3, %v1250
        %v1252 = vrot.slane %v1004, %v1251
        %v1253 = vlaneseq
        %v1254 = vshrl.u32 %v1253, 7
        %v1255 = vsub.s32 4, %v1254
        %v1256 = vrot.slane %v1004, %v1255
        %v1257 = vlaneseq
        %v1258 = vshrl.u32 %v1257, 7
        %v1259 = vsub.s32 5, %v1258
        %v1260 = vrot.slane %v1004, %v1259
        %v1261 = vlaneseq
        %v1262 = vshrl.u32 %v1261, 7
        %v1263 = vsub.s32 6, %v1262
        %v1264 = vrot.slane %v1004, %v1263
        %v1265 = vlaneseq
        %v1266 = vshrl.u32 %v1265, 7
        %v1267 = vsub.s32 7, %v1266
        %v1268 = vrot.slane %v1004, %v1267
        %v1269 = vcombine.low %v1016, %v1020
        %v1270 = vcombine.low %v1024, %v1028
        %v1271 = vcombine.low %v1032, %v1036
        %v1272 = vcombine.low %v1040, %v1044
        %v1274 = vunpack.c.l.s4 1966171168
        %v1275 = vunpack.c.0.s8 %v1274
        %v1276 = vlaneseq
        %v1277 = vshrl.u32 %v1276, 7
        %v1278 = vsub.s32 %v1275, %v1277
        %v1279 = vrot.slane %v1269, %v1278
        %v1281 = vunpack.c.l.s4 1966171168
        %v1282 = vunpack.c.0.s8 %v1281
        %v1283 = vlaneseq
        %v1284 = vshrl.u32 %v1283, 7
        %v1285 = vsub.s32 %v1282, %v1284
        %v1286 = vrot.slane %v1270, %v1285
        %v1288 = vunpack.c.l.s4 1966171168
        %v1289 = vunpack.c.0.s8 %v1288
        %v1290 = vlaneseq
        %v1291 = vshrl.u32 %v1290, 7
        %v1292 = vsub.s32 %v1289, %v1291
        %v1293 = vrot.slane %v1271, %v1292
        %v1295 = vunpack.c.l.s4 1966171168
        %v1296 = vunpack.c.0.s8 %v1295
        %v1297 = vlaneseq
        %v1298 = vshrl.u32 %v1297, 7
        %v1299 = vsub.s32 %v1296, %v1298
        %v1300 = vrot.slane %v1272, %v1299
        %v1301 = vcombine.low %v1279, %v1286
        %v1302 = vcombine.low %v1293, %v1300
        %v1304 = vunpack.c.l.s4 1966171168
        %v1305 = vunpack.c.0.s8 %v1304
        %v1306 = vlaneseq
        %v1307 = vshrl.u32 %v1306, 7
        %v1308 = vsub.s32 %v1305, %v1307
        %v1309 = vrot.slane %v1301, %v1308
        %v1311 = vunpack.c.l.s4 1966171168
        %v1312 = vunpack.c.0.s8 %v1311
        %v1313 = vlaneseq
        %v1314 = vshrl.u32 %v1313, 7
        %v1315 = vsub.s32 %v1312, %v1314
        %v1316 = vrot.slane %v1302, %v1315
        %v1317 = vcombine.low %v1309, %v1316
        %v1318 = vcombine.low %v1048, %v1052
        %v1319 = vcombine.low %v1056, %v1060
        %v1320 = vcombine.low %v1064, %v1068
        %v1321 = vcombine.low %v1072, %v1076
        %v1323 = vunpack.c.l.s4 1966171168
        %v1324 = vunpack.c.0.s8 %v1323
        %v1325 = vlaneseq
        %v1326 = vshrl.u32 %v1325, 7
        %v1327 = vsub.s32 %v1324, %v1326
        %v1328 = vrot.slane %v1318, %v1327
        %v1330 = vunpack.c.l.s4 1966171168
        %v1331 = vunpack.c.0.s8 %v1330
        %v1332 = vlaneseq
        %v1333 = vshrl.u32 %v1332, 7
        %v1334 = vsub.s32 %v1331, %v1333
        %v1335 = vrot.slane %v1319, %v1334
        %v1337 = vunpack.c.l.s4 1966171168
        %v1338 = vunpack.c.0.s8 %v1337
        %v1339 = vlaneseq
        %v1340 = vshrl.u32 %v1339, 7
        %v1341 = vsub.s32 %v1338, %v1340
        %v1342 = vrot.slane %v1320, %v1341
        %v1344 = vunpack.c.l.s4 1966171168
        %v1345 = vunpack.c.0.s8 %v1344
        %v1346 = vlaneseq
        %v1347 = vshrl.u32 %v1346, 7
        %v1348 = vsub.s32 %v1345, %v1347
        %v1349 = vrot.slane %v1321, %v1348
        %v1350 = vcombine.low %v1328, %v1335
        %v1351 = vcombine.low %v1342, %v1349
        %v1353 = vunpack.c.l.s4 1966171168
        %v1354 = vunpack.c.0.s8 %v1353
        %v1355 = vlaneseq
        %v1356 = vshrl.u32 %v1355, 7
        %v1357 = vsub.s32 %v1354, %v1356
        %v1358 = vrot.slane %v1350, %v1357
        %v1360 = vunpack.c.l.s4 1966171168
        %v1361 = vunpack.c.0.s8 %v1360
        %v1362 = vlaneseq
        %v1363 = vshrl.u32 %v1362, 7
        %v1364 = vsub.s32 %v1361, %v1363
        %v1365 = vrot.slane %v1351, %v1364
        %v1366 = vcombine.low %v1358, %v1365
        %v1367 = vcombine.low %v1080, %v1084
        %v1368 = vcombine.low %v1088, %v1092
        %v1369 = vcombine.low %v1096, %v1100
        %v1370 = vcombine.low %v1104, %v1108
        %v1372 = vunpack.c.l.s4 1966171168
        %v1373 = vunpack.c.0.s8 %v1372
        %v1374 = vlaneseq
        %v1375 = vshrl.u32 %v1374, 7
        %v1376 = vsub.s32 %v1373, %v1375
        %v1377 = vrot.slane %v1367, %v1376
        %v1379 = vunpack.c.l.s4 1966171168
        %v1380 = vunpack.c.0.s8 %v1379
        %v1381 = vlaneseq
        %v1382 = vshrl.u32 %v1381, 7
        %v1383 = vsub.s32 %v1380, %v1382
        %v1384 = vrot.slane %v1368, %v1383
        %v1386 = vunpack.c.l.s4 1966171168
        %v1387 = vunpack.c.0.s8 %v1386
        %v1388 = vlaneseq
        %v1389 = vshrl.u32 %v1388, 7
        %v1390 = vsub.s32 %v1387, %v1389
        %v1391 = vrot.slane %v1369, %v1390
        %v1393 = vunpack.c.l.s4 1966171168
        %v1394 = vunpack.c.0.s8 %v1393
        %v1395 = vlaneseq
        %v1396 = vshrl.u32 %v1395, 7
        %v1397 = vsub.s32 %v1394, %v1396
        %v1398 = vrot.slane %v1370, %v1397
        %v1399 = vcombine.low %v1377, %v1384
        %v1400 = vcombine.low %v1391, %v1398
        %v1402 = vunpack.c.l.s4 1966171168
        %v1403 = vunpack.c.0.s8 %v1402
        %v1404 = vlaneseq
        %v1405 = vshrl.u32 %v1404, 7
        %v1406 = vsub.s32 %v1403, %v1405
        %v1407 = vrot.slane %v1399, %v1406
        %v1409 = vunpack.c.l.s4 1966171168
        %v1410 = vunpack.c.0.s8 %v1409
        %v1411 = vlaneseq
        %v1412 = vshrl.u32 %v1411, 7
        %v1413 = vsub.s32 %v1410, %v1412
        %v1414 = vrot.slane %v1400, %v1413
        %v1415 = vcombine.low %v1407, %v1414
        %v1416 = vcombine.low %v1112, %v1116
        %v1417 = vcombine.low %v1120, %v1124
        %v1418 = vcombine.low %v1128, %v1132
        %v1419 = vcombine.low %v1136, %v1140
        %v1421 = vunpack.c.l.s4 1966171168
        %v1422 = vunpack.c.0.s8 %v1421
        %v1423 = vlaneseq
        %v1424 = vshrl.u32 %v1423, 7
        %v1425 = vsub.s32 %v1422, %v1424
        %v1426 = vrot.slane %v1416, %v1425
        %v1428 = vunpack.c.l.s4 1966171168
        %v1429 = vunpack.c.0.s8 %v1428
        %v1430 = vlaneseq
        %v1431 = vshrl.u32 %v1430, 7
        %v1432 = vsub.s32 %v1429, %v1431
        %v1433 = vrot.slane %v1417, %v1432
        %v1435 = vunpack.c.l.s4 1966171168
        %v1436 = vunpack.c.0.s8 %v1435
        %v1437 = vlaneseq
        %v1438 = vshrl.u32 %v1437, 7
        %v1439 = vsub.s32 %v1436, %v1438
        %v1440 = vrot.slane %v1418, %v1439
        %v1442 = vunpack.c.l.s4 1966171168
        %v1443 = vunpack.c.0.s8 %v1442
        %v1444 = vlaneseq
        %v1445 = vshrl.u32 %v1444, 7
        %v1446 = vsub.s32 %v1443, %v1445
        %v1447 = vrot.slane %v1419, %v1446
        %v1448 = vcombine.low %v1426, %v1433
        %v1449 = vcombine.low %v1440, %v1447
        %v1451 = vunpack.c.l.s4 1966171168
        %v1452 = vunpack.c.0.s8 %v1451
        %v1453 = vlaneseq
        %v1454 = vshrl.u32 %v1453, 7
        %v1455 = vsub.s32 %v1452, %v1454
        %v1456 = vrot.slane %v1448, %v1455
        %v1458 = vunpack.c.l.s4 1966171168
        %v1459 = vunpack.c.0.s8 %v1458
        %v1460 = vlaneseq
        %v1461 = vshrl.u32 %v1460, 7
        %v1462 = vsub.s32 %v1459, %v1461
        %v1463 = vrot.slane %v1449, %v1462
        %v1464 = vcombine.low %v1456, %v1463
        %v1465 = vcombine.low %v1144, %v1148
        %v1466 = vcombine.low %v1152, %v1156
        %v1467 = vcombine.low %v1160, %v1164
        %v1468 = vcombine.low %v1168, %v1172
        %v1470 = vunpack.c.l.s4 1966171168
        %v1471 = vunpack.c.0.s8 %v1470
        %v1472 = vlaneseq
        %v1473 = vshrl.u32 %v1472, 7
        %v1474 = vsub.s32 %v1471, %v1473
        %v1475 = vrot.slane %v1465, %v1474
        %v1477 = vunpack.c.l.s4 1966171168
        %v1478 = vunpack.c.0.s8 %v1477
        %v1479 = vlaneseq
        %v1480 = vshrl.u32 %v1479, 7
        %v1481 = vsub.s32 %v1478, %v1480
        %v1482 = vrot.slane %v1466, %v1481
        %v1484 = vunpack.c.l.s4 1966171168
        %v1485 = vunpack.c.0.s8 %v1484
        %v1486 = vlaneseq
        %v1487 = vshrl.u32 %v1486, 7
        %v1488 = vsub.s32 %v1485, %v1487
        %v1489 = vrot.slane %v1467, %v1488
        %v1491 = vunpack.c.l.s4 1966171168
        %v1492 = vunpack.c.0.s8 %v1491
        %v1493 = vlaneseq
        %v1494 = vshrl.u32 %v1493, 7
        %v1495 = vsub.s32 %v1492, %v1494
        %v1496 = vrot.slane %v1468, %v1495
        %v1497 = vcombine.low %v1475, %v1482
        %v1498 = vcombine.low %v1489, %v1496
        %v1500 = vunpack.c.l.s4 1966171168
        %v1501 = vunpack.c.0.s8 %v1500
        %v1502 = vlaneseq
        %v1503 = vshrl.u32 %v1502, 7
        %v1504 = vsub.s32 %v1501, %v1503
        %v1505 = vrot.slane %v1497, %v1504
        %v1507 = vunpack.c.l.s4 1966171168
        %v1508 = vunpack.c.0.s8 %v1507
        %v1509 = vlaneseq
        %v1510 = vshrl.u32 %v1509, 7
        %v1511 = vsub.s32 %v1508, %v1510
        %v1512 = vrot.slane %v1498, %v1511
        %v1513 = vcombine.low %v1505, %v1512
        %v1514 = vcombine.low %v1176, %v1180
        %v1515 = vcombine.low %v1184, %v1188
        %v1516 = vcombine.low %v1192, %v1196
        %v1517 = vcombine.low %v1200, %v1204
        %v1519 = vunpack.c.l.s4 1966171168
        %v1520 = vunpack.c.0.s8 %v1519
        %v1521 = vlaneseq
        %v1522 = vshrl.u32 %v1521, 7
        %v1523 = vsub.s32 %v1520, %v1522
        %v1524 = vrot.slane %v1514, %v1523
        %v1526 = vunpack.c.l.s4 1966171168
        %v1527 = vunpack.c.0.s8 %v1526
        %v1528 = vlaneseq
        %v1529 = vshrl.u32 %v1528, 7
        %v1530 = vsub.s32 %v1527, %v1529
        %v1531 = vrot.slane %v1515, %v1530
        %v1533 = vunpack.c.l.s4 1966171168
        %v1534 = vunpack.c.0.s8 %v1533
        %v1535 = vlaneseq
        %v1536 = vshrl.u32 %v1535, 7
        %v1537 = vsub.s32 %v1534, %v1536
        %v1538 = vrot.slane %v1516, %v1537
        %v1540 = vunpack.c.l.s4 1966171168
        %v1541 = vunpack.c.0.s8 %v1540
        %v1542 = vlaneseq
        %v1543 = vshrl.u32 %v1542, 7
        %v1544 = vsub.s32 %v1541, %v1543
        %v1545 = vrot.slane %v1517, %v1544
        %v1546 = vcombine.low %v1524, %v1531
        %v1547 = vcombine.low %v1538, %v1545
        %v1549 = vunpack.c.l.s4 1966171168
        %v1550 = vunpack.c.0.s8 %v1549
        %v1551 = vlaneseq
        %v1552 = vshrl.u32 %v1551, 7
        %v1553 = vsub.s32 %v1550, %v1552
        %v1554 = vrot.slane %v1546, %v1553
        %v1556 = vunpack.c.l.s4 1966171168
        %v1557 = vunpack.c.0.s8 %v1556
        %v1558 = vlaneseq
        %v1559 = vshrl.u32 %v1558, 7
        %v1560 = vsub.s32 %v1557, %v1559
        %v1561 = vrot.slane %v1547, %v1560
        %v1562 = vcombine.low %v1554, %v1561
        %v1563 = vcombine.low %v1208, %v1212
        %v1564 = vcombine.low %v1216, %v1220
        %v1565 = vcombine.low %v1224, %v1228
        %v1566 = vcombine.low %v1232, %v1236
        %v1568 = vunpack.c.l.s4 1966171168
        %v1569 = vunpack.c.0.s8 %v1568
        %v1570 = vlaneseq
        %v1571 = vshrl.u32 %v1570, 7
        %v1572 = vsub.s32 %v1569, %v1571
        %v1573 = vrot.slane %v1563, %v1572
        %v1575 = vunpack.c.l.s4 1966171168
        %v1576 = vunpack.c.0.s8 %v1575
        %v1577 = vlaneseq
        %v1578 = vshrl.u32 %v1577, 7
        %v1579 = vsub.s32 %v1576, %v1578
        %v1580 = vrot.slane %v1564, %v1579
        %v1582 = vunpack.c.l.s4 1966171168
        %v1583 = vunpack.c.0.s8 %v1582
        %v1584 = vlaneseq
        %v1585 = vshrl.u32 %v1584, 7
        %v1586 = vsub.s32 %v1583, %v1585
        %v1587 = vrot.slane %v1565, %v1586
        %v1589 = vunpack.c.l.s4 1966171168
        %v1590 = vunpack.c.0.s8 %v1589
        %v1591 = vlaneseq
        %v1592 = vshrl.u32 %v1591, 7
        %v1593 = vsub.s32 %v1590, %v1592
        %v1594 = vrot.slane %v1566, %v1593
        %v1595 = vcombine.low %v1573, %v1580
        %v1596 = vcombine.low %v1587, %v1594
        %v1598 = vunpack.c.l.s4 1966171168
        %v1599 = vunpack.c.0.s8 %v1598
        %v1600 = vlaneseq
        %v1601 = vshrl.u32 %v1600, 7
        %v1602 = vsub.s32 %v1599, %v1601
        %v1603 = vrot.slane %v1595, %v1602
        %v1605 = vunpack.c.l.s4 1966171168
        %v1606 = vunpack.c.0.s8 %v1605
        %v1607 = vlaneseq
        %v1608 = vshrl.u32 %v1607, 7
        %v1609 = vsub.s32 %v1606, %v1608
        %v1610 = vrot.slane %v1596, %v1609
        %v1611 = vcombine.low %v1603, %v1610
        %v1612 = vcombine.low %v1240, %v1244
        %v1613 = vcombine.low %v1248, %v1252
        %v1614 = vcombine.low %v1256, %v1260
        %v1615 = vcombine.low %v1264, %v1268
        %v1617 = vunpack.c.l.s4 1966171168
        %v1618 = vunpack.c.0.s8 %v1617
        %v1619 = vlaneseq
        %v1620 = vshrl.u32 %v1619, 7
        %v1621 = vsub.s32 %v1618, %v1620
        %v1622 = vrot.slane %v1612, %v1621
        %v1624 = vunpack.c.l.s4 1966171168
        %v1625 = vunpack.c.0.s8 %v1624
        %v1626 = vlaneseq
        %v1627 = vshrl.u32 %v1626, 7
        %v1628 = vsub.s32 %v1625, %v1627
        %v1629 = vrot.slane %v1613, %v1628
        %v1631 = vunpack.c.l.s4 1966171168
        %v1632 = vunpack.c.0.s8 %v1631
        %v1633 = vlaneseq
        %v1634 = vshrl.u32 %v1633, 7
        %v1635 = vsub.s32 %v1632, %v1634
        %v1636 = vrot.slane %v1614, %v1635
        %v1638 = vunpack.c.l.s4 1966171168
        %v1639 = vunpack.c.0.s8 %v1638
        %v1640 = vlaneseq
        %v1641 = vshrl.u32 %v1640, 7
        %v1642 = vsub.s32 %v1639, %v1641
        %v1643 = vrot.slane %v1615, %v1642
        %v1644 = vcombine.low %v1622, %v1629
        %v1645 = vcombine.low %v1636, %v1643
        %v1647 = vunpack.c.l.s4 1966171168
        %v1648 = vunpack.c.0.s8 %v1647
        %v1649 = vlaneseq
        %v1650 = vshrl.u32 %v1649, 7
        %v1651 = vsub.s32 %v1648, %v1650
        %v1652 = vrot.slane %v1644, %v1651
        %v1654 = vunpack.c.l.s4 1966171168
        %v1655 = vunpack.c.0.s8 %v1654
        %v1656 = vlaneseq
        %v1657 = vshrl.u32 %v1656, 7
        %v1658 = vsub.s32 %v1655, %v1657
        %v1659 = vrot.slane %v1645, %v1658
        %v1660 = vcombine.low %v1652, %v1659
        %1661 = vset.pattern.permute.xlu0 0
        %1662 = vperm.xlu0 %1661, %v1317
        %v1663 = vpop.permute.xlu0 %1662
        %1664 = vset.pattern.permute.xlu0 0
        %1665 = vperm.xlu0 %1664, %v1366
        %v1666 = vpop.permute.xlu0 %1665
        %1667 = vset.pattern.permute.xlu0 0
        %1668 = vperm.xlu0 %1667, %v1415
        %v1669 = vpop.permute.xlu0 %1668
        %1670 = vset.pattern.permute.xlu0 0
        %1671 = vperm.xlu0 %1670, %v1464
        %v1672 = vpop.permute.xlu0 %1671
        %1673 = vset.pattern.permute.xlu0 0
        %1674 = vperm.xlu0 %1673, %v1513
        %v1675 = vpop.permute.xlu0 %1674
        %1676 = vset.pattern.permute.xlu0 0
        %1677 = vperm.xlu0 %1676, %v1562
        %v1678 = vpop.permute.xlu0 %1677
        %1679 = vset.pattern.permute.xlu0 0
        %1680 = vperm.xlu0 %1679, %v1611
        %v1681 = vpop.permute.xlu0 %1680
        %1682 = vset.pattern.permute.xlu0 0
        %1683 = vperm.xlu0 %1682, %v1660
        %v1684 = vpop.permute.xlu0 %1683
        %v1685 = vlaneseq
        %v1686 = vshrl.u32 %v1685, 7
        %v1687 = vsub.s32 %v916, %v1686
        %v1688 = vrot.slane %v1663, %v1687
        %v1689 = vlaneseq
        %v1690 = vshrl.u32 %v1689, 7
        %v1691 = vsub.s32 %v921, %v1690
        %v1692 = vrot.slane %v1666, %v1691
        %v1693 = vsel %vm926, %v1692, %v1688
        %v1694 = vlaneseq
        %v1695 = vshrl.u32 %v1694, 7
        %v1696 = vsub.s32 %v928, %v1695
        %v1697 = vrot.slane %v1669, %v1696
        %v1698 = vsel %vm933, %v1697, %v1693
        %v1699 = vlaneseq
        %v1700 = vshrl.u32 %v1699, 7
        %v1701 = vsub.s32 %v935, %v1700
        %v1702 = vrot.slane %v1672, %v1701
        %v1703 = vsel %vm940, %v1702, %v1698
        %v1704 = vlaneseq
        %v1705 = vshrl.u32 %v1704, 7
        %v1706 = vsub.s32 %v942, %v1705
        %v1707 = vrot.slane %v1675, %v1706
        %v1708 = vsel %vm947, %v1707, %v1703
        %v1709 = vlaneseq
        %v1710 = vshrl.u32 %v1709, 7
        %v1711 = vsub.s32 %v949, %v1710
        %v1712 = vrot.slane %v1678, %v1711
        %v1713 = vsel %vm954, %v1712, %v1708
        %v1714 = vlaneseq
        %v1715 = vshrl.u32 %v1714, 7
        %v1716 = vsub.s32 %v956, %v1715
        %v1717 = vrot.slane %v1681, %v1716
        %v1718 = vsel %vm961, %v1717, %v1713
        %v1719 = vlaneseq
        %v1720 = vshrl.u32 %v1719, 7
        %v1721 = vsub.s32 %v963, %v1720
        %v1722 = vrot.slane %v1684, %v1721
        %v1723 = vsel %vm968, %v1722, %v1718
        %v1725 = vunpack.c.l.s4 1966171168
        %v1726 = vunpack.c.0.s8 %v1725
        %v1727 = vlaneseq
        %v1728 = vshrl.u32 %v1727, 7
        %v1729 = vsub.s32 %v1726, %v1728
        %v1730 = vrot.slane %v1723, %v1729
        %v1732 = vunpack.c.l.s4 1966171168
        %v1733 = vunpack.c.0.s8 %v1732
        %v1734 = vlaneseq
        %v1735 = vshrl.u32 %v1734, 7
        %v1736 = vsub.s32 %v1733, %v1735
        %v1737 = vrot.slane %v1730, %v1736
        %v1739 = vmax.f32 %v988, %v1737
        %1740 = vst.msk [vmem:[#allocation3] sm:$0x1] %vm986, %v1739
        %p1741 = scmp.eq.s32.totalorder %s25, 1
        // Predicated region
        $region41: #{tpu_custom_call.1} parent=31 // pred_check
          %p1742 = pneg %p1741
        $region42: #{tpu_custom_call.1} parent=31 // pred_check_branch
          %1744 = sbr.rel (%p1742) target = $region44
        $region43: #{tpu_custom_call.1} parent=31 // pred_region
          %v1745 = vld [vmem:[#allocation2] sm:$0x1]
          %v1746 = vmul.f32 %v1745, 0.00390625
          %v1747 = vld [vmem:[#allocation3] sm:$0x1]
          %v1749 = vlaneseq
          %v1750 = vshrl.u32 %v1749, 7
          %v1751 = vsub.s32 0, %v1750
          %v1752 = vrot.slane %v1747, %v1751
          %vm1754 = vcmask 1040384
          %v1755 = vsel %vm1754, %v1746, %v1752
          %v1756 = vld [vmem:[%s1] sm:$0xff]
          %v1757 = vld [vmem:[%s1 + $0x8] sm:$0xff]
          %v1758 = vld [vmem:[%s1 + $0x10] sm:$0xff]
          %v1759 = vld [vmem:[%s1 + $0x18] sm:$0xff]
          %v1760 = vld [vmem:[%s1 + $0x20] sm:$0xff]
          %v1761 = vld [vmem:[%s1 + $0x28] sm:$0xff]
          %v1762 = vld [vmem:[%s1 + $0x30] sm:$0xff]
          %v1763 = vld [vmem:[%s1 + $0x38] sm:$0xff]
          %vm1764 = vcmask 523264
          %v1766 = vsel %vm1764, %v1755, 0
          %1768 = vmatprep.subr.mxu0 0.0
          %1769 = vmatpush1.msra.mxu0 0.0
          %1770 = vmatprep.subr.mxu0 0.0
          %1771 = vmatpush1.msra.mxu0 0.0
          %1772 = vmatprep.subr.mxu0 0.0
          %1773 = vmatpush1.msra.mxu0 0.0
          %1774 = vmatprep.subr.mxu0 0.0
          %1775 = vmatpush1.msra.mxu0 0.0
          %1776 = vmatprep.subr.mxu0 0.0
          %1777 = vmatpush1.msra.mxu0 0.0
          %1778 = vmatprep.subr.mxu0 0.0
          %1779 = vmatpush1.msra.mxu0 0.0
          %1780 = vmatprep.subr.mxu0 0.0
          %1781 = vmatpush1.msra.mxu0 0.0
          %1782 = vmatprep.subr.mxu0 0.0
          %1783 = vmatpush1.msra.mxu0 0.0
          %1784 = vmatprep.subr.mxu0 0.0
          %1785 = vmatpush1.msra.mxu0 %v1763
          %1786 = vmatprep.subr.mxu0 0.0
          %1787 = vmatpush1.msra.mxu0 %v1762
          %1788 = vmatprep.subr.mxu0 0.0
          %1789 = vmatpush1.msra.mxu0 %v1761
          %1790 = vmatprep.subr.mxu0 0.0
          %1791 = vmatpush1.msra.mxu0 %v1760
          %1792 = vmatprep.subr.mxu0 0.0
          %1793 = vmatpush1.msra.mxu0 %v1759
          %1794 = vmatprep.subr.mxu0 0.0
          %1795 = vmatpush1.msra.mxu0 %v1758
          %1796 = vmatprep.subr.mxu0 0.0
          %1797 = vmatpush1.msra.mxu0 %v1757
          %1798 = vmatprep.subr.mxu0 0.0
          %1799 = vmatpush1.msra.mxu0 %v1756
          %1800 = vmatprep.subr.mxu0 0.0
          %1801 = vmatpush2.msra.mxu0 0.0
          %1802 = vmatprep.subr.mxu0 0.0
          %1803 = vmatpush2.msra.mxu0 0.0
          %1804 = vmatprep.subr.mxu0 0.0
          %1805 = vmatpush2.msra.mxu0 0.0
          %1806 = vmatprep.subr.mxu0 0.0
          %1807 = vmatpush2.msra.mxu0 0.0
          %1808 = vmatprep.subr.mxu0 0.0
          %1809 = vmatpush2.msra.mxu0 0.0
          %1810 = vmatprep.subr.mxu0 0.0
          %1811 = vmatpush2.msra.mxu0 0.0
          %1812 = vmatprep.subr.mxu0 0.0
          %1813 = vmatpush2.msra.mxu0 0.0
          %1814 = vmatprep.subr.mxu0 0.0
          %1815 = vmatpush2.msra.mxu0 0.0
          %1816 = vmatprep.subr.mxu0 0.0
          %1817 = vmatpush2.msra.mxu0 0.0
          %1818 = vmatprep.subr.mxu0 0.0
          %1819 = vmatpush2.msra.mxu0 0.0
          %1820 = vmatprep.subr.mxu0 0.0
          %1821 = vmatpush2.msra.mxu0 0.0
          %1822 = vmatprep.subr.mxu0 0.0
          %1823 = vmatpush2.msra.mxu0 0.0
          %1824 = vmatprep.subr.mxu0 0.0
          %1825 = vmatpush2.msra.mxu0 0.0
          %1826 = vmatprep.subr.mxu0 0.0
          %1827 = vmatpush2.msra.mxu0 0.0
          %1828 = vmatprep.subr.mxu0 0.0
          %1829 = vmatpush2.msra.mxu0 0.0
          %1830 = vmatprep.subr.mxu0 0.0
          %1831 = vmatpush2.msra.mxu0 0.0
          %1832 = vmatprep.mubr.f32.mxu0 0.0
          %1833 = vmatmul.mubr.f32.gmra.mxu0 %v1766
          %v1834 = vpop.f32.mrf.mxu0
          %v1835 = vadd.f32 0.0, %v1834
          %v1836 = vpop.f32.mrf.mxu0
          %1837 = vdwg.mxu0
          %v1838 = vmax.f32 %v1835, 0.0
          %v1839 = vld [vmem:[%s2] sm:$0xf]
          %vm1840 = vcmask 31744
          %v1842 = vsel %vm1840, %v1838, 0
          %vm1844 = vcmask 1043456
          %v1846 = vsel %vm1844, %v1839, 0
          %1848 = vmatprep.subr.mxu0 0.0
          %1849 = vmatpush1.msra.mxu0 0.0
          %1850 = vmatprep.subr.mxu0 0.0
          %1851 = vmatpush1.msra.mxu0 0.0
          %1852 = vmatprep.subr.mxu0 0.0
          %1853 = vmatpush1.msra.mxu0 0.0
          %1854 = vmatprep.subr.mxu0 0.0
          %1855 = vmatpush1.msra.mxu0 0.0
          %1856 = vmatprep.subr.mxu0 0.0
          %1857 = vmatpush1.msra.mxu0 0.0
          %1858 = vmatprep.subr.mxu0 0.0
          %1859 = vmatpush1.msra.mxu0 0.0
          %1860 = vmatprep.subr.mxu0 0.0
          %1861 = vmatpush1.msra.mxu0 0.0
          %1862 = vmatprep.subr.mxu0 0.0
          %1863 = vmatpush1.msra.mxu0 0.0
          %1864 = vmatprep.subr.mxu0 0.0
          %1865 = vmatpush1.msra.mxu0 0.0
          %1866 = vmatprep.subr.mxu0 0.0
          %1867 = vmatpush1.msra.mxu0 0.0
          %1868 = vmatprep.subr.mxu0 0.0
          %1869 = vmatpush1.msra.mxu0 0.0
          %1870 = vmatprep.subr.mxu0 0.0
          %1871 = vmatpush1.msra.mxu0 0.0
          %1872 = vmatprep.subr.mxu0 0.0
          %1873 = vmatpush1.msra.mxu0 0.0
          %1874 = vmatprep.subr.mxu0 0.0
          %1875 = vmatpush1.msra.mxu0 0.0
          %1876 = vmatprep.subr.mxu0 0.0
          %1877 = vmatpush1.msra.mxu0 0.0
          %1878 = vmatprep.subr.mxu0 0.0
          %1879 = vmatpush1.msra.mxu0 %v1846
          %1880 = vmatprep.subr.mxu0 0.0
          %1881 = vmatpush2.msra.mxu0 0.0
          %1882 = vmatprep.subr.mxu0 0.0
          %1883 = vmatpush2.msra.mxu0 0.0
          %1884 = vmatprep.subr.mxu0 0.0
          %1885 = vmatpush2.msra.mxu0 0.0
          %1886 = vmatprep.subr.mxu0 0.0
          %1887 = vmatpush2.msra.mxu0 0.0
          %1888 = vmatprep.subr.mxu0 0.0
          %1889 = vmatpush2.msra.mxu0 0.0
          %1890 = vmatprep.subr.mxu0 0.0
          %1891 = vmatpush2.msra.mxu0 0.0
          %1892 = vmatprep.subr.mxu0 0.0
          %1893 = vmatpush2.msra.mxu0 0.0
          %1894 = vmatprep.subr.mxu0 0.0
          %1895 = vmatpush2.msra.mxu0 0.0
          %1896 = vmatprep.subr.mxu0 0.0
          %1897 = vmatpush2.msra.mxu0 0.0
          %1898 = vmatprep.subr.mxu0 0.0
          %1899 = vmatpush2.msra.mxu0 0.0
          %1900 = vmatprep.subr.mxu0 0.0
          %1901 = vmatpush2.msra.mxu0 0.0
          %1902 = vmatprep.subr.mxu0 0.0
          %1903 = vmatpush2.msra.mxu0 0.0
          %1904 = vmatprep.subr.mxu0 0.0
          %1905 = vmatpush2.msra.mxu0 0.0
          %1906 = vmatprep.subr.mxu0 0.0
          %1907 = vmatpush2.msra.mxu0 0.0
          %1908 = vmatprep.subr.mxu0 0.0
          %1909 = vmatpush2.msra.mxu0 0.0
          %1910 = vmatprep.subr.mxu0 0.0
          %1911 = vmatpush2.msra.mxu0 0.0
          %1912 = vmatprep.mubr.f32.mxu0 0.0
          %1913 = vmatmul.mubr.f32.gmra.mxu0 %v1842
          %v1914 = vpop.f32.mrf.mxu0
          %v1915 = vadd.f32 0.0, %v1914
          %v1916 = vpop.f32.mrf.mxu0
          %1917 = vdwg.mxu0
          %v1919 = vrot.slane %v1915, 1
          %v1921 = vadd.f32 %v1915, %v1919
          %v1922 = vxor.u32 %v1921, 2147483648
          %v1923 = vmul.f32 %v1922, 1.442695
          %v1924 = vpow.pop %v1923
          %v1925 = vadd.f32 %v1924, 1.0
          %v1926 = vrcp.pop %v1925
          %v1927 = vmul.f32 1.0, %v1926
          %1928 = vst [vmem:[%s202] sm:$0x1] %v1927
        $region44: #{tpu_custom_call.1} parent=31 // pred_fallthru
          _
        %s1929 = sand.u32 %s110, 1
        %s1930 = scalar_lea.sflag [#allocation6], %s1929
        %s1931 = sand.u32 %s110, 1
        %s1932 = scalar_lea.vmem [#allocation7], %s1931
        // Predicated region
        $region45: #{tpu_custom_call.1} parent=31 // pred_check
          %p1933 = pneg %p120
        $region46: #{tpu_custom_call.1} parent=31 // pred_check_branch
          %1935 = sbr.rel (%p1933) target = $region48
        $region47: #{tpu_custom_call.1} parent=31 // pred_region
          %s1937 = ssub.s32 16, 16
          %1938 = vsyncadd %s1930, %s1937
          %s1939 = smul.addr %s24, 16
          %s1940 = scalar_lea.hbm %s3, %s1939
          %s1942 = sshll.u32 %s1932, 4
          %s1943 = int_to_ptr.vmem [resolvable:$true] %s1942
          %1945 = dma.vmem_to_hbm [thread:$0]  %s1943, 16, %s1940, %s1930
        $region48: #{tpu_custom_call.1} parent=31 // pred_fallthru
          _
      $region32: #{tpu_custom_call.1} parent=5 // pred_fallthru
        _
      %p1946 = scmp.le.s32.totalorder 2, %s15
      // Predicated region
      $region49: #{tpu_custom_call.1} parent=5 // pred_check
        %p1947 = pneg %p1946
      $region50: #{tpu_custom_call.1} parent=5 // pred_check_branch
        %1949 = sbr.rel (%p1947) target = $region52
      $region51: #{tpu_custom_call.1} parent=5 // pred_region
        %s1950 = ssub.s32 %s15, 2
        // Predicated region
        $region53: #{tpu_custom_call.1} parent=51 // pred_check
          %p1951 = pneg %p126
        $region54: #{tpu_custom_call.1} parent=51 // pred_check_branch
          %1953 = sbr.rel (%p1951) target = $region56
        $region55: #{tpu_custom_call.1} parent=51 // pred_region
          %s1954 = sand.u32 %s111, 1
          %s1955 = scalar_lea.sflag [#allocation6], %s1954
          %s1956 = sand.u32 %s111, 1
          %s1957 = scalar_lea.vmem [#allocation7], %s1956
          %1958 = dma.done %s1955, 16
        $region56: #{tpu_custom_call.1} parent=51 // pred_fallthru
          _
      $region52: #{tpu_custom_call.1} parent=5 // pred_fallthru
        _
    $region6: #{tpu_custom_call.1} parent=1 // loop_footer
      %s19 = sadd.s32 1, %s15
    $region7: #{tpu_custom_call.1} parent=1 // loop_footer_branch
      %14 = sbr.rel target = $region3
    $region8: #{tpu_custom_call.1} parent=1 // loop_exit
      _
    %1959 = vsyncpa [#allocation5], 1
    %s1960 = scalar_lea.sflag [#allocation5], 1
    %1961 = vsyncpa %s1960, 1
    %1962 = vsyncpa [#allocation6], 1
    %s1963 = scalar_lea.sflag [#allocation6], 1
    %1964 = vsyncpa %s1963, 1

</llo_original>
